<compile_context>
chip_gen: v7x
topology: tpu7x:2x2x1
jax: 0.10.0
libtpu: 0.0.40
codegen_flags: <defaults>
</compile_context>

<pallas_src>
import jax
import jax.numpy as jnp
from jax import lax
from jax.experimental import pallas as pl
from jax.experimental.pallas import tpu as pltpu


def _rnn_att_kernel(
    x_ref,        # (S, I)                input sequence
    gru_ref,      # (I + H + 2, 3H)       [W_i_cat; W_h_cat; b_ih; b_hh]
    attp_ref,     # (H + 3, H)            [W_sent; b_sent; w_ctx_row; h0]
    fc_ref,       # (H + 1, C)            [W_fc; b_fc]
    out_ref,      # (1, C)                output: logits
    attw_ref,     # (1, S)                output: attention weights (lane-dense)
    f_scratch,    # VMEM (S, H)           all GRU hidden states
):
    S, I = x_ref.shape
    H = attp_ref.shape[1]
    H2 = 2 * H
    H3 = 3 * H

    # ---- unpack parameter slabs (static slices of VMEM refs) ----
    w_i = gru_ref[0:I, :]                      # (I, 3H)  gate order (r, z, n)
    w_h = gru_ref[I:I + H, :]                  # (H, 3H)
    b_ih = gru_ref[I + H:I + H + 1, :]         # (1, 3H)
    b_hh = gru_ref[I + H + 1:I + H + 2, :]     # (1, 3H)
    b_hh_n = b_hh[:, H2:H3]                    # (1, H)   new-gate hidden bias

    w_sent = attp_ref[0:H, :]                  # (H, H)
    b_sent = attp_ref[H:H + 1, :]              # (1, H)
    wc_row = attp_ref[H + 1:H + 2, :]          # (1, H)   (context weight, row form)
    h0 = attp_ref[H + 2:H + 3, :]              # (1, H)

    w_fc = fc_ref[0:H, :]                      # (H, C)
    b_fc = fc_ref[H:H + 1, :]                  # (1, C)

    # ---- GRU ----
    # Hoisted, time-independent input projection for all gates, b_ih folded in.
    gi_all = jnp.dot(x_ref[...], w_i,
                     preferred_element_type=jnp.float32) + b_ih            # (S, 3H)
    # Fold the r/z slice of b_hh in here too (hoisted once, off the serial chain).
    gi_rz_all = gi_all[:, 0:H2] + b_hh[:, 0:H2]                            # (S, 2H)
    gi_n_all = gi_all[:, H2:H3]                                            # (S, H)

    # Statically unrolled recurrence; h lives in vregs (no h round-trip to VMEM).
    h = h0
    for t in range(S):
        gh = jnp.dot(h, w_h, preferred_element_type=jnp.float32)           # (1, 3H)
        rz = jax.nn.sigmoid(gi_rz_all[t:t + 1, :] + gh[:, 0:H2])           # (1, 2H)
        r = rz[:, 0:H]
        z = rz[:, H:H2]
        n = jnp.tanh(gi_n_all[t:t + 1, :] + r * (gh[:, H2:H3] + b_hh_n))
        h = (1.0 - z) * n + z * h
        f_scratch[t:t + 1, :] = h

    f = f_scratch[...]                                                     # (S, H)

    # ---- attention ----
    # u = tanh(f @ W_sent + b_sent), nan -> 0   (kept for torch-helper parity)
    u = jnp.tanh(jnp.dot(f, w_sent, preferred_element_type=jnp.float32) + b_sent)
    u = jnp.where(jnp.isnan(u), 0.0, u)

    # scores = tanh(u @ W_ctx): VPU mul + lane reduce instead of a 1-lane-wide
    # MXU matmul.  nan -> 0.
    s = jnp.tanh(jnp.sum(u * wc_row, axis=1, keepdims=True))               # (S, 1)
    s = jnp.where(jnp.isnan(s), 0.0, s)

    # Lane-dense "transpose" (S,1) -> (1,S): tiny iota-select + sublane reduce
    # (VPU/XLU slots; avoids a relayout-heavy true transpose).
    rows = lax.broadcasted_iota(jnp.int32, (S, S), 0)
    cols = lax.broadcasted_iota(jnp.int32, (S, S), 1)
    s_row = jnp.sum(jnp.where(rows == cols, s, 0.0),
                    axis=0, keepdims=True)                                 # (1, S)

    # softmax over the sequence axis, done once in lane-dense form
    # (EUP reciprocal instead of a VPU divide).
    m = jnp.max(s_row, axis=1, keepdims=True)                              # (1, 1)
    e = jnp.exp(s_row - m)                                                 # (1, S)
    denom = jnp.sum(e, axis=1, keepdims=True)                              # (1, 1)
    alpha_row = e * pl.reciprocal(denom, approx=True)                      # (1, S)

    attw_ref[...] = alpha_row                                              # (1, S)

    # ---- attention-weighted sum of hidden states + final linear layer ----
    # Single (1,S)@(S,H) MXU push instead of broadcast-mul + cross-sublane sum.
    im = jnp.dot(alpha_row, f, preferred_element_type=jnp.float32)         # (1, H)
    out_ref[...] = (jnp.dot(im, w_fc, preferred_element_type=jnp.float32)
                    + b_fc)                                                # (1, C)


def init_params(key, input_size=4, hidden_size=32, num_classes=4):
    """Deterministic synthetic parameters packed into three DMA slabs."""
    ks = jax.random.split(key, 12)
    H, I, C = hidden_size, input_size, num_classes
    k = 1.0 / jnp.sqrt(H)

    def unif(key, shape):
        return jax.random.uniform(key, shape, jnp.float32, -k, k)

    # GRU weights, PyTorch layout (3H, in), gate order (r, z, n).
    w_ih = unif(ks[0], (3 * H, I))
    w_hh = unif(ks[1], (3 * H, H))
    b_ih = unif(ks[2], (3 * H,))
    b_hh = unif(ks[3], (3 * H,))

    # Transposed so the kernel computes x @ W_i_cat and h @ W_h_cat with the
    # three gates concatenated along the lane axis.
    w_i_cat = w_ih.T                                   # (I, 3H)
    w_h_cat = w_hh.T                                   # (H, 3H)
    gru_slab = jnp.concatenate(
        [w_i_cat, w_h_cat, b_ih.reshape(1, 3 * H), b_hh.reshape(1, 3 * H)],
        axis=0).astype(jnp.float32)                    # (I + H + 2, 3H)

    # Attention parameters (torch: normal(0, 0.05); sent_bias uninitialized in
    # torch -> deterministic init here).  h0 = zeros (rnn_model._init_hidden_state).
    w_sent = 0.05 * jax.random.normal(ks[4], (H, H), jnp.float32)
    b_sent = 0.05 * jax.random.normal(ks[5], (1, H), jnp.float32)
    w_ctx = 0.05 * jax.random.normal(ks[6], (H, 1), jnp.float32)
    h0 = jnp.zeros((1, H), jnp.float32)
    att_slab = jnp.concatenate([w_sent, b_sent, w_ctx.T, h0],
                               axis=0).astype(jnp.float32)   # (H + 3, H)

    # Final fully-connected layer.
    w_fc = unif(ks[7], (H, C))
    b_fc = unif(ks[8], (1, C))
    fc_slab = jnp.concatenate([w_fc, b_fc], axis=0).astype(jnp.float32)  # (H + 1, C)

    return dict(gru_slab=gru_slab, att_slab=att_slab, fc_slab=fc_slab)


@jax.jit
def rnn_model_forward(x, gru_slab, att_slab, fc_slab):
    """x: any float array with size divisible by 4 (torch: input.view(-1,1,4))."""
    x2d = x.reshape(-1, 4).astype(jnp.float32)                  # (S, 4)
    S = x2d.shape[0]
    H = att_slab.shape[1]
    C = fc_slab.shape[1]

    vmem = pl.BlockSpec(memory_space=pltpu.MemorySpace.VMEM)
    logits, att = pl.pallas_call(
        _rnn_att_kernel,
        out_shape=(jax.ShapeDtypeStruct((1, C), jnp.float32),
                   jax.ShapeDtypeStruct((1, S), jnp.float32)),
        in_specs=[vmem, vmem, vmem, vmem],
        out_specs=(vmem, vmem),
        scratch_shapes=[pltpu.VMEM((S, H), jnp.float32)],
    )(x2d, gru_slab, att_slab, fc_slab)

    # torch module returns (im_output, output_att_wts_norm, output_att_wts);
    # in the reference both attention outputs are the same tensor.
    return logits, att, att


if __name__ == "__main__":
    key = jax.random.PRNGKey(0)
    k_param, k_x = jax.random.split(key)

    NCLASS = 4
    NH_IM = 32          # hidden_size
    SEQ = 8             # input.view(-1, 1, 4) -> 8 time steps

    params = init_params(k_param, input_size=4, hidden_size=NH_IM,
                         num_classes=NCLASS)
    x = jax.random.normal(k_x, (SEQ, 4), jnp.float32)

    logits, att_norm, att = rnn_model_forward(
        x, params["gru_slab"], params["att_slab"], params["fc_slab"])
    jax.block_until_ready((logits, att_norm, att))

    assert logits.shape == (1, NCLASS)
    assert att_norm.shape == (1, SEQ)
    assert bool(jnp.all(jnp.isfinite(logits)))
    assert bool(jnp.all(jnp.isfinite(att_norm)))
    # softmax sanity (loose tolerance: denominator uses approx EUP reciprocal)
    assert abs(float(jnp.sum(att_norm)) - 1.0) < 1e-2

    print("KERNEL_OK")
</pallas_src>

<mosaic_0001>
module attributes {stable_mosaic.version = 11 : i64} {
  func.func @_rnn_att_kernel(%arg0: memref<8x4xf32, #tpu.memory_space<vmem>>, %arg1: memref<38x96xf32, #tpu.memory_space<vmem>>, %arg2: memref<35x32xf32, #tpu.memory_space<vmem>>, %arg3: memref<33x4xf32, #tpu.memory_space<vmem>>, %arg4: memref<1x4xf32, #tpu.memory_space<vmem>>, %arg5: memref<1x8xf32, #tpu.memory_space<vmem>>, %arg6: memref<8x32xf32, #tpu.memory_space<vmem>>) attributes {dimension_semantics = [], scalar_prefetch = 0 : i64, scratch_operands = 1 : i64, tpu.core_type = #tpu.core_type<tc>} {
    %c0 = arith.constant 0 : index
    %c0_0 = arith.constant 0 : index
    %0 = vector.load %arg1[%c0, %c0_0] : memref<38x96xf32, #tpu.memory_space<vmem>>, vector<4x96xf32>
    %c4 = arith.constant 4 : index
    %c0_1 = arith.constant 0 : index
    %1 = vector.load %arg1[%c4, %c0_1] : memref<38x96xf32, #tpu.memory_space<vmem>>, vector<32x96xf32>
    %c36 = arith.constant 36 : index
    %c0_2 = arith.constant 0 : index
    %2 = vector.load %arg1[%c36, %c0_2] : memref<38x96xf32, #tpu.memory_space<vmem>>, vector<1x96xf32>
    %c37 = arith.constant 37 : index
    %c0_3 = arith.constant 0 : index
    %3 = vector.load %arg1[%c37, %c0_3] : memref<38x96xf32, #tpu.memory_space<vmem>>, vector<1x96xf32>
    %4 = vector.extract_strided_slice %3 {offsets = [0, 64], sizes = [1, 32], strides = [1, 1]} : vector<1x96xf32> to vector<1x32xf32>
    %c0_4 = arith.constant 0 : index
    %c0_5 = arith.constant 0 : index
    %5 = vector.load %arg2[%c0_4, %c0_5] : memref<35x32xf32, #tpu.memory_space<vmem>>, vector<32x32xf32>
    %c32 = arith.constant 32 : index
    %c0_6 = arith.constant 0 : index
    %6 = vector.load %arg2[%c32, %c0_6] : memref<35x32xf32, #tpu.memory_space<vmem>>, vector<1x32xf32>
    %c33 = arith.constant 33 : index
    %c0_7 = arith.constant 0 : index
    %7 = vector.load %arg2[%c33, %c0_7] : memref<35x32xf32, #tpu.memory_space<vmem>>, vector<1x32xf32>
    %c34 = arith.constant 34 : index
    %c0_8 = arith.constant 0 : index
    %8 = vector.load %arg2[%c34, %c0_8] : memref<35x32xf32, #tpu.memory_space<vmem>>, vector<1x32xf32>
    %c0_9 = arith.constant 0 : index
    %c0_10 = arith.constant 0 : index
    %9 = vector.load %arg3[%c0_9, %c0_10] : memref<33x4xf32, #tpu.memory_space<vmem>>, vector<32x4xf32>
    %c32_11 = arith.constant 32 : index
    %c0_12 = arith.constant 0 : index
    %10 = vector.load %arg3[%c32_11, %c0_12] : memref<33x4xf32, #tpu.memory_space<vmem>>, vector<1x4xf32>
    %c0_13 = arith.constant 0 : index
    %c0_14 = arith.constant 0 : index
    %11 = vector.load %arg0[%c0_13, %c0_14] : memref<8x4xf32, #tpu.memory_space<vmem>>, vector<8x4xf32>
    %cst = arith.constant dense<0.000000e+00> : vector<8x96xf32>
    %12 = tpu.matmul %11, %0, %cst {dimension_numbers = #tpu.dot_dimension_numbers<[1], [0], [0], [1], [0, 0, 1, 1], [], []>} : vector<8x4xf32>, vector<4x96xf32>, vector<8x96xf32> -> vector<8x96xf32>
    %13 = vector.broadcast %2 : vector<1x96xf32> to vector<8x96xf32>
    %14 = arith.addf %12, %13 : vector<8x96xf32>
    %15 = vector.extract_strided_slice %14 {offsets = [0, 0], sizes = [8, 64], strides = [1, 1]} : vector<8x96xf32> to vector<8x64xf32>
    %16 = vector.extract_strided_slice %3 {offsets = [0, 0], sizes = [1, 64], strides = [1, 1]} : vector<1x96xf32> to vector<1x64xf32>
    %17 = vector.broadcast %16 : vector<1x64xf32> to vector<8x64xf32>
    %18 = arith.addf %15, %17 : vector<8x64xf32>
    %19 = vector.extract_strided_slice %14 {offsets = [0, 64], sizes = [8, 32], strides = [1, 1]} : vector<8x96xf32> to vector<8x32xf32>
    %cst_15 = arith.constant dense<0.000000e+00> : vector<1x96xf32>
    %20 = tpu.matmul %8, %1, %cst_15 {dimension_numbers = #tpu.dot_dimension_numbers<[1], [0], [0], [1], [0, 0, 1, 1], [], []>} : vector<1x32xf32>, vector<32x96xf32>, vector<1x96xf32> -> vector<1x96xf32>
    %21 = vector.extract_strided_slice %18 {offsets = [0, 0], sizes = [1, 64], strides = [1, 1]} : vector<8x64xf32> to vector<1x64xf32>
    %22 = vector.extract_strided_slice %20 {offsets = [0, 0], sizes = [1, 64], strides = [1, 1]} : vector<1x96xf32> to vector<1x64xf32>
    %23 = arith.addf %21, %22 : vector<1x64xf32>
    %24 = arith.negf %23 : vector<1x64xf32>
    %25 = math.exp %24 : vector<1x64xf32>
    %cst_16 = arith.constant 1.000000e+00 : f32
    %26 = vector.broadcast %cst_16 : f32 to vector<1x64xf32>
    %27 = arith.addf %26, %25 : vector<1x64xf32>
    %28 = arith.divf %26, %27 : vector<1x64xf32>
    %29 = vector.extract_strided_slice %28 {offsets = [0, 0], sizes = [1, 32], strides = [1, 1]} : vector<1x64xf32> to vector<1x32xf32>
    %30 = vector.extract_strided_slice %28 {offsets = [0, 32], sizes = [1, 32], strides = [1, 1]} : vector<1x64xf32> to vector<1x32xf32>
    %31 = vector.extract_strided_slice %19 {offsets = [0, 0], sizes = [1, 32], strides = [1, 1]} : vector<8x32xf32> to vector<1x32xf32>
    %32 = vector.extract_strided_slice %20 {offsets = [0, 64], sizes = [1, 32], strides = [1, 1]} : vector<1x96xf32> to vector<1x32xf32>
    %33 = arith.addf %32, %4 : vector<1x32xf32>
    %34 = arith.mulf %29, %33 : vector<1x32xf32>
    %35 = arith.addf %31, %34 : vector<1x32xf32>
    %36 = math.tanh %35 : vector<1x32xf32>
    %cst_17 = arith.constant 1.000000e+00 : f32
    %37 = vector.broadcast %cst_17 : f32 to vector<1x32xf32>
    %38 = arith.subf %37, %30 : vector<1x32xf32>
    %39 = arith.mulf %38, %36 : vector<1x32xf32>
    %40 = arith.mulf %30, %8 : vector<1x32xf32>
    %41 = arith.addf %39, %40 : vector<1x32xf32>
    %c0_18 = arith.constant 0 : index
    %c0_19 = arith.constant 0 : index
    %42 = vector.load %arg6[%c0_18, %c0_19] : memref<8x32xf32, #tpu.memory_space<vmem>>, vector<1x32xf32>
    tpu.vector_store %arg6[%c0_18, %c0_19], %41 {strides = array<i32>} : memref<8x32xf32, #tpu.memory_space<vmem>>, vector<1x32xf32>,
    %cst_20 = arith.constant dense<0.000000e+00> : vector<1x96xf32>
    %43 = tpu.matmul %41, %1, %cst_20 {dimension_numbers = #tpu.dot_dimension_numbers<[1], [0], [0], [1], [0, 0, 1, 1], [], []>} : vector<1x32xf32>, vector<32x96xf32>, vector<1x96xf32> -> vector<1x96xf32>
    %44 = vector.extract_strided_slice %18 {offsets = [1, 0], sizes = [1, 64], strides = [1, 1]} : vector<8x64xf32> to vector<1x64xf32>
    %45 = vector.extract_strided_slice %43 {offsets = [0, 0], sizes = [1, 64], strides = [1, 1]} : vector<1x96xf32> to vector<1x64xf32>
    %46 = arith.addf %44, %45 : vector<1x64xf32>
    %47 = arith.negf %46 : vector<1x64xf32>
    %48 = math.exp %47 : vector<1x64xf32>
    %cst_21 = arith.constant 1.000000e+00 : f32
    %49 = vector.broadcast %cst_21 : f32 to vector<1x64xf32>
    %50 = arith.addf %49, %48 : vector<1x64xf32>
    %51 = arith.divf %49, %50 : vector<1x64xf32>
    %52 = vector.extract_strided_slice %51 {offsets = [0, 0], sizes = [1, 32], strides = [1, 1]} : vector<1x64xf32> to vector<1x32xf32>
    %53 = vector.extract_strided_slice %51 {offsets = [0, 32], sizes = [1, 32], strides = [1, 1]} : vector<1x64xf32> to vector<1x32xf32>
    %54 = vector.extract_strided_slice %19 {offsets = [1, 0], sizes = [1, 32], strides = [1, 1]} : vector<8x32xf32> to vector<1x32xf32>
    %55 = vector.extract_strided_slice %43 {offsets = [0, 64], sizes = [1, 32], strides = [1, 1]} : vector<1x96xf32> to vector<1x32xf32>
    %56 = arith.addf %55, %4 : vector<1x32xf32>
    %57 = arith.mulf %52, %56 : vector<1x32xf32>
    %58 = arith.addf %54, %57 : vector<1x32xf32>
    %59 = math.tanh %58 : vector<1x32xf32>
    %cst_22 = arith.constant 1.000000e+00 : f32
    %60 = vector.broadcast %cst_22 : f32 to vector<1x32xf32>
    %61 = arith.subf %60, %53 : vector<1x32xf32>
    %62 = arith.mulf %61, %59 : vector<1x32xf32>
    %63 = arith.mulf %53, %41 : vector<1x32xf32>
    %64 = arith.addf %62, %63 : vector<1x32xf32>
    %c1 = arith.constant 1 : index
    %c0_23 = arith.constant 0 : index
    %65 = vector.load %arg6[%c1, %c0_23] : memref<8x32xf32, #tpu.memory_space<vmem>>, vector<1x32xf32>
    tpu.vector_store %arg6[%c1, %c0_23], %64 {strides = array<i32>} : memref<8x32xf32, #tpu.memory_space<vmem>>, vector<1x32xf32>,
    %cst_24 = arith.constant dense<0.000000e+00> : vector<1x96xf32>
    %66 = tpu.matmul %64, %1, %cst_24 {dimension_numbers = #tpu.dot_dimension_numbers<[1], [0], [0], [1], [0, 0, 1, 1], [], []>} : vector<1x32xf32>, vector<32x96xf32>, vector<1x96xf32> -> vector<1x96xf32>
    %67 = vector.extract_strided_slice %18 {offsets = [2, 0], sizes = [1, 64], strides = [1, 1]} : vector<8x64xf32> to vector<1x64xf32>
    %68 = vector.extract_strided_slice %66 {offsets = [0, 0], sizes = [1, 64], strides = [1, 1]} : vector<1x96xf32> to vector<1x64xf32>
    %69 = arith.addf %67, %68 : vector<1x64xf32>
    %70 = arith.negf %69 : vector<1x64xf32>
    %71 = math.exp %70 : vector<1x64xf32>
    %cst_25 = arith.constant 1.000000e+00 : f32
    %72 = vector.broadcast %cst_25 : f32 to vector<1x64xf32>
    %73 = arith.addf %72, %71 : vector<1x64xf32>
    %74 = arith.divf %72, %73 : vector<1x64xf32>
    %75 = vector.extract_strided_slice %74 {offsets = [0, 0], sizes = [1, 32], strides = [1, 1]} : vector<1x64xf32> to vector<1x32xf32>
    %76 = vector.extract_strided_slice %74 {offsets = [0, 32], sizes = [1, 32], strides = [1, 1]} : vector<1x64xf32> to vector<1x32xf32>
    %77 = vector.extract_strided_slice %19 {offsets = [2, 0], sizes = [1, 32], strides = [1, 1]} : vector<8x32xf32> to vector<1x32xf32>
    %78 = vector.extract_strided_slice %66 {offsets = [0, 64], sizes = [1, 32], strides = [1, 1]} : vector<1x96xf32> to vector<1x32xf32>
    %79 = arith.addf %78, %4 : vector<1x32xf32>
    %80 = arith.mulf %75, %79 : vector<1x32xf32>
    %81 = arith.addf %77, %80 : vector<1x32xf32>
    %82 = math.tanh %81 : vector<1x32xf32>
    %cst_26 = arith.constant 1.000000e+00 : f32
    %83 = vector.broadcast %cst_26 : f32 to vector<1x32xf32>
    %84 = arith.subf %83, %76 : vector<1x32xf32>
    %85 = arith.mulf %84, %82 : vector<1x32xf32>
    %86 = arith.mulf %76, %64 : vector<1x32xf32>
    %87 = arith.addf %85, %86 : vector<1x32xf32>
    %c2 = arith.constant 2 : index
    %c0_27 = arith.constant 0 : index
    %88 = vector.load %arg6[%c2, %c0_27] : memref<8x32xf32, #tpu.memory_space<vmem>>, vector<1x32xf32>
    tpu.vector_store %arg6[%c2, %c0_27], %87 {strides = array<i32>} : memref<8x32xf32, #tpu.memory_space<vmem>>, vector<1x32xf32>,
    %cst_28 = arith.constant dense<0.000000e+00> : vector<1x96xf32>
    %89 = tpu.matmul %87, %1, %cst_28 {dimension_numbers = #tpu.dot_dimension_numbers<[1], [0], [0], [1], [0, 0, 1, 1], [], []>} : vector<1x32xf32>, vector<32x96xf32>, vector<1x96xf32> -> vector<1x96xf32>
    %90 = vector.extract_strided_slice %18 {offsets = [3, 0], sizes = [1, 64], strides = [1, 1]} : vector<8x64xf32> to vector<1x64xf32>
    %91 = vector.extract_strided_slice %89 {offsets = [0, 0], sizes = [1, 64], strides = [1, 1]} : vector<1x96xf32> to vector<1x64xf32>
    %92 = arith.addf %90, %91 : vector<1x64xf32>
    %93 = arith.negf %92 : vector<1x64xf32>
    %94 = math.exp %93 : vector<1x64xf32>
    %cst_29 = arith.constant 1.000000e+00 : f32
    %95 = vector.broadcast %cst_29 : f32 to vector<1x64xf32>
    %96 = arith.addf %95, %94 : vector<1x64xf32>
    %97 = arith.divf %95, %96 : vector<1x64xf32>
    %98 = vector.extract_strided_slice %97 {offsets = [0, 0], sizes = [1, 32], strides = [1, 1]} : vector<1x64xf32> to vector<1x32xf32>
    %99 = vector.extract_strided_slice %97 {offsets = [0, 32], sizes = [1, 32], strides = [1, 1]} : vector<1x64xf32> to vector<1x32xf32>
    %100 = vector.extract_strided_slice %19 {offsets = [3, 0], sizes = [1, 32], strides = [1, 1]} : vector<8x32xf32> to vector<1x32xf32>
    %101 = vector.extract_strided_slice %89 {offsets = [0, 64], sizes = [1, 32], strides = [1, 1]} : vector<1x96xf32> to vector<1x32xf32>
    %102 = arith.addf %101, %4 : vector<1x32xf32>
    %103 = arith.mulf %98, %102 : vector<1x32xf32>
    %104 = arith.addf %100, %103 : vector<1x32xf32>
    %105 = math.tanh %104 : vector<1x32xf32>
    %cst_30 = arith.constant 1.000000e+00 : f32
    %106 = vector.broadcast %cst_30 : f32 to vector<1x32xf32>
    %107 = arith.subf %106, %99 : vector<1x32xf32>
    %108 = arith.mulf %107, %105 : vector<1x32xf32>
    %109 = arith.mulf %99, %87 : vector<1x32xf32>
    %110 = arith.addf %108, %109 : vector<1x32xf32>
    %c3 = arith.constant 3 : index
    %c0_31 = arith.constant 0 : index
    %111 = vector.load %arg6[%c3, %c0_31] : memref<8x32xf32, #tpu.memory_space<vmem>>, vector<1x32xf32>
    tpu.vector_store %arg6[%c3, %c0_31], %110 {strides = array<i32>} : memref<8x32xf32, #tpu.memory_space<vmem>>, vector<1x32xf32>,
    %cst_32 = arith.constant dense<0.000000e+00> : vector<1x96xf32>
    %112 = tpu.matmul %110, %1, %cst_32 {dimension_numbers = #tpu.dot_dimension_numbers<[1], [0], [0], [1], [0, 0, 1, 1], [], []>} : vector<1x32xf32>, vector<32x96xf32>, vector<1x96xf32> -> vector<1x96xf32>
    %113 = vector.extract_strided_slice %18 {offsets = [4, 0], sizes = [1, 64], strides = [1, 1]} : vector<8x64xf32> to vector<1x64xf32>
    %114 = vector.extract_strided_slice %112 {offsets = [0, 0], sizes = [1, 64], strides = [1, 1]} : vector<1x96xf32> to vector<1x64xf32>
    %115 = arith.addf %113, %114 : vector<1x64xf32>
    %116 = arith.negf %115 : vector<1x64xf32>
    %117 = math.exp %116 : vector<1x64xf32>
    %cst_33 = arith.constant 1.000000e+00 : f32
    %118 = vector.broadcast %cst_33 : f32 to vector<1x64xf32>
    %119 = arith.addf %118, %117 : vector<1x64xf32>
    %120 = arith.divf %118, %119 : vector<1x64xf32>
    %121 = vector.extract_strided_slice %120 {offsets = [0, 0], sizes = [1, 32], strides = [1, 1]} : vector<1x64xf32> to vector<1x32xf32>
    %122 = vector.extract_strided_slice %120 {offsets = [0, 32], sizes = [1, 32], strides = [1, 1]} : vector<1x64xf32> to vector<1x32xf32>
    %123 = vector.extract_strided_slice %19 {offsets = [4, 0], sizes = [1, 32], strides = [1, 1]} : vector<8x32xf32> to vector<1x32xf32>
    %124 = vector.extract_strided_slice %112 {offsets = [0, 64], sizes = [1, 32], strides = [1, 1]} : vector<1x96xf32> to vector<1x32xf32>
    %125 = arith.addf %124, %4 : vector<1x32xf32>
    %126 = arith.mulf %121, %125 : vector<1x32xf32>
    %127 = arith.addf %123, %126 : vector<1x32xf32>
    %128 = math.tanh %127 : vector<1x32xf32>
    %cst_34 = arith.constant 1.000000e+00 : f32
    %129 = vector.broadcast %cst_34 : f32 to vector<1x32xf32>
    %130 = arith.subf %129, %122 : vector<1x32xf32>
    %131 = arith.mulf %130, %128 : vector<1x32xf32>
    %132 = arith.mulf %122, %110 : vector<1x32xf32>
    %133 = arith.addf %131, %132 : vector<1x32xf32>
    %c4_35 = arith.constant 4 : index
    %c0_36 = arith.constant 0 : index
    %134 = vector.load %arg6[%c4_35, %c0_36] : memref<8x32xf32, #tpu.memory_space<vmem>>, vector<1x32xf32>
    tpu.vector_store %arg6[%c4_35, %c0_36], %133 {strides = array<i32>} : memref<8x32xf32, #tpu.memory_space<vmem>>, vector<1x32xf32>,
    %cst_37 = arith.constant dense<0.000000e+00> : vector<1x96xf32>
    %135 = tpu.matmul %133, %1, %cst_37 {dimension_numbers = #tpu.dot_dimension_numbers<[1], [0], [0], [1], [0, 0, 1, 1], [], []>} : vector<1x32xf32>, vector<32x96xf32>, vector<1x96xf32> -> vector<1x96xf32>
    %136 = vector.extract_strided_slice %18 {offsets = [5, 0], sizes = [1, 64], strides = [1, 1]} : vector<8x64xf32> to vector<1x64xf32>
    %137 = vector.extract_strided_slice %135 {offsets = [0, 0], sizes = [1, 64], strides = [1, 1]} : vector<1x96xf32> to vector<1x64xf32>
    %138 = arith.addf %136, %137 : vector<1x64xf32>
    %139 = arith.negf %138 : vector<1x64xf32>
    %140 = math.exp %139 : vector<1x64xf32>
    %cst_38 = arith.constant 1.000000e+00 : f32
    %141 = vector.broadcast %cst_38 : f32 to vector<1x64xf32>
    %142 = arith.addf %141, %140 : vector<1x64xf32>
    %143 = arith.divf %141, %142 : vector<1x64xf32>
    %144 = vector.extract_strided_slice %143 {offsets = [0, 0], sizes = [1, 32], strides = [1, 1]} : vector<1x64xf32> to vector<1x32xf32>
    %145 = vector.extract_strided_slice %143 {offsets = [0, 32], sizes = [1, 32], strides = [1, 1]} : vector<1x64xf32> to vector<1x32xf32>
    %146 = vector.extract_strided_slice %19 {offsets = [5, 0], sizes = [1, 32], strides = [1, 1]} : vector<8x32xf32> to vector<1x32xf32>
    %147 = vector.extract_strided_slice %135 {offsets = [0, 64], sizes = [1, 32], strides = [1, 1]} : vector<1x96xf32> to vector<1x32xf32>
    %148 = arith.addf %147, %4 : vector<1x32xf32>
    %149 = arith.mulf %144, %148 : vector<1x32xf32>
    %150 = arith.addf %146, %149 : vector<1x32xf32>
    %151 = math.tanh %150 : vector<1x32xf32>
    %cst_39 = arith.constant 1.000000e+00 : f32
    %152 = vector.broadcast %cst_39 : f32 to vector<1x32xf32>
    %153 = arith.subf %152, %145 : vector<1x32xf32>
    %154 = arith.mulf %153, %151 : vector<1x32xf32>
    %155 = arith.mulf %145, %133 : vector<1x32xf32>
    %156 = arith.addf %154, %155 : vector<1x32xf32>
    %c5 = arith.constant 5 : index
    %c0_40 = arith.constant 0 : index
    %157 = vector.load %arg6[%c5, %c0_40] : memref<8x32xf32, #tpu.memory_space<vmem>>, vector<1x32xf32>
    tpu.vector_store %arg6[%c5, %c0_40], %156 {strides = array<i32>} : memref<8x32xf32, #tpu.memory_space<vmem>>, vector<1x32xf32>,
    %cst_41 = arith.constant dense<0.000000e+00> : vector<1x96xf32>
    %158 = tpu.matmul %156, %1, %cst_41 {dimension_numbers = #tpu.dot_dimension_numbers<[1], [0], [0], [1], [0, 0, 1, 1], [], []>} : vector<1x32xf32>, vector<32x96xf32>, vector<1x96xf32> -> vector<1x96xf32>
    %159 = vector.extract_strided_slice %18 {offsets = [6, 0], sizes = [1, 64], strides = [1, 1]} : vector<8x64xf32> to vector<1x64xf32>
    %160 = vector.extract_strided_slice %158 {offsets = [0, 0], sizes = [1, 64], strides = [1, 1]} : vector<1x96xf32> to vector<1x64xf32>
    %161 = arith.addf %159, %160 : vector<1x64xf32>
    %162 = arith.negf %161 : vector<1x64xf32>
    %163 = math.exp %162 : vector<1x64xf32>
    %cst_42 = arith.constant 1.000000e+00 : f32
    %164 = vector.broadcast %cst_42 : f32 to vector<1x64xf32>
    %165 = arith.addf %164, %163 : vector<1x64xf32>
    %166 = arith.divf %164, %165 : vector<1x64xf32>
    %167 = vector.extract_strided_slice %166 {offsets = [0, 0], sizes = [1, 32], strides = [1, 1]} : vector<1x64xf32> to vector<1x32xf32>
    %168 = vector.extract_strided_slice %166 {offsets = [0, 32], sizes = [1, 32], strides = [1, 1]} : vector<1x64xf32> to vector<1x32xf32>
    %169 = vector.extract_strided_slice %19 {offsets = [6, 0], sizes = [1, 32], strides = [1, 1]} : vector<8x32xf32> to vector<1x32xf32>
    %170 = vector.extract_strided_slice %158 {offsets = [0, 64], sizes = [1, 32], strides = [1, 1]} : vector<1x96xf32> to vector<1x32xf32>
    %171 = arith.addf %170, %4 : vector<1x32xf32>
    %172 = arith.mulf %167, %171 : vector<1x32xf32>
    %173 = arith.addf %169, %172 : vector<1x32xf32>
    %174 = math.tanh %173 : vector<1x32xf32>
    %cst_43 = arith.constant 1.000000e+00 : f32
    %175 = vector.broadcast %cst_43 : f32 to vector<1x32xf32>
    %176 = arith.subf %175, %168 : vector<1x32xf32>
    %177 = arith.mulf %176, %174 : vector<1x32xf32>
    %178 = arith.mulf %168, %156 : vector<1x32xf32>
    %179 = arith.addf %177, %178 : vector<1x32xf32>
    %c6 = arith.constant 6 : index
    %c0_44 = arith.constant 0 : index
    %180 = vector.load %arg6[%c6, %c0_44] : memref<8x32xf32, #tpu.memory_space<vmem>>, vector<1x32xf32>
    tpu.vector_store %arg6[%c6, %c0_44], %179 {strides = array<i32>} : memref<8x32xf32, #tpu.memory_space<vmem>>, vector<1x32xf32>,
    %cst_45 = arith.constant dense<0.000000e+00> : vector<1x96xf32>
    %181 = tpu.matmul %179, %1, %cst_45 {dimension_numbers = #tpu.dot_dimension_numbers<[1], [0], [0], [1], [0, 0, 1, 1], [], []>} : vector<1x32xf32>, vector<32x96xf32>, vector<1x96xf32> -> vector<1x96xf32>
    %182 = vector.extract_strided_slice %18 {offsets = [7, 0], sizes = [1, 64], strides = [1, 1]} : vector<8x64xf32> to vector<1x64xf32>
    %183 = vector.extract_strided_slice %181 {offsets = [0, 0], sizes = [1, 64], strides = [1, 1]} : vector<1x96xf32> to vector<1x64xf32>
    %184 = arith.addf %182, %183 : vector<1x64xf32>
    %185 = arith.negf %184 : vector<1x64xf32>
    %186 = math.exp %185 : vector<1x64xf32>
    %cst_46 = arith.constant 1.000000e+00 : f32
    %187 = vector.broadcast %cst_46 : f32 to vector<1x64xf32>
    %188 = arith.addf %187, %186 : vector<1x64xf32>
    %189 = arith.divf %187, %188 : vector<1x64xf32>
    %190 = vector.extract_strided_slice %189 {offsets = [0, 0], sizes = [1, 32], strides = [1, 1]} : vector<1x64xf32> to vector<1x32xf32>
    %191 = vector.extract_strided_slice %189 {offsets = [0, 32], sizes = [1, 32], strides = [1, 1]} : vector<1x64xf32> to vector<1x32xf32>
    %192 = vector.extract_strided_slice %19 {offsets = [7, 0], sizes = [1, 32], strides = [1, 1]} : vector<8x32xf32> to vector<1x32xf32>
    %193 = vector.extract_strided_slice %181 {offsets = [0, 64], sizes = [1, 32], strides = [1, 1]} : vector<1x96xf32> to vector<1x32xf32>
    %194 = arith.addf %193, %4 : vector<1x32xf32>
    %195 = arith.mulf %190, %194 : vector<1x32xf32>
    %196 = arith.addf %192, %195 : vector<1x32xf32>
    %197 = math.tanh %196 : vector<1x32xf32>
    %cst_47 = arith.constant 1.000000e+00 : f32
    %198 = vector.broadcast %cst_47 : f32 to vector<1x32xf32>
    %199 = arith.subf %198, %191 : vector<1x32xf32>
    %200 = arith.mulf %199, %197 : vector<1x32xf32>
    %201 = arith.mulf %191, %179 : vector<1x32xf32>
    %202 = arith.addf %200, %201 : vector<1x32xf32>
    %c7 = arith.constant 7 : index
    %c0_48 = arith.constant 0 : index
    %203 = vector.load %arg6[%c7, %c0_48] : memref<8x32xf32, #tpu.memory_space<vmem>>, vector<1x32xf32>
    tpu.vector_store %arg6[%c7, %c0_48], %202 {strides = array<i32>} : memref<8x32xf32, #tpu.memory_space<vmem>>, vector<1x32xf32>,
    %c0_49 = arith.constant 0 : index
    %c0_50 = arith.constant 0 : index
    %204 = vector.load %arg6[%c0_49, %c0_50] : memref<8x32xf32, #tpu.memory_space<vmem>>, vector<8x32xf32>
    %cst_51 = arith.constant dense<0.000000e+00> : vector<8x32xf32>
    %205 = tpu.matmul %204, %5, %cst_51 {dimension_numbers = #tpu.dot_dimension_numbers<[1], [0], [0], [1], [0, 0, 1, 1], [], []>} : vector<8x32xf32>, vector<32x32xf32>, vector<8x32xf32> -> vector<8x32xf32>
    %206 = vector.broadcast %6 : vector<1x32xf32> to vector<8x32xf32>
    %207 = arith.addf %205, %206 : vector<8x32xf32>
    %208 = math.tanh %207 : vector<8x32xf32>
    %209 = arith.cmpf one, %208, %208 : vector<8x32xf32>
    %cst_52 = arith.constant 0.000000e+00 : f32
    %210 = vector.broadcast %cst_52 : f32 to vector<8x32xf32>
    %211 = arith.select %209, %210, %208 : vector<8x32xi1>, vector<8x32xf32>
    %212 = vector.broadcast %7 : vector<1x32xf32> to vector<8x32xf32>
    %213 = arith.mulf %211, %212 : vector<8x32xf32>
    %cst_53 = arith.constant dense<0.000000e+00> : vector<8xf32>
    %214 = vector.multi_reduction <add>, %213, %cst_53 [1] : vector<8x32xf32> to vector<8xf32>
    %215 = vector.shape_cast %214 : vector<8xf32> to vector<8x1xf32>
    %216 = math.tanh %215 : vector<8x1xf32>
    %217 = arith.cmpf one, %216, %216 : vector<8x1xf32>
    %cst_54 = arith.constant 0.000000e+00 : f32
    %218 = vector.broadcast %cst_54 : f32 to vector<8x1xf32>
    %219 = arith.select %217, %218, %216 : vector<8x1xi1>, vector<8x1xf32>
    %220 = tpu.iota {dimensions = array<i32: 0>} : vector<8x8xi32>
    %221 = tpu.iota {dimensions = array<i32: 1>} : vector<8x8xi32>
    %222 = arith.cmpi eq, %220, %221 : vector<8x8xi32>
    %cst_55 = arith.constant 0.000000e+00 : f32
    %223 = vector.shape_cast %219 : vector<8x1xf32> to vector<8x1xf32>
    %224 = vector.broadcast %223 : vector<8x1xf32> to vector<8x8xf32>
    %225 = vector.broadcast %cst_55 : f32 to vector<8x8xf32>
    %226 = arith.select %222, %224, %225 : vector<8x8xi1>, vector<8x8xf32>
    %cst_56 = arith.constant dense<0.000000e+00> : vector<8xf32>
    %227 = vector.multi_reduction <add>, %226, %cst_56 [0] : vector<8x8xf32> to vector<8xf32>
    %228 = vector.shape_cast %227 : vector<8xf32> to vector<1x8xf32>
    %cst_57 = arith.constant dense<0xFF800000> : vector<1xf32>
    %229 = vector.multi_reduction <maximumf>, %228, %cst_57 [1] : vector<1x8xf32> to vector<1xf32>
    %230 = vector.shape_cast %229 : vector<1xf32> to vector<1x1xf32>
    %231 = vector.broadcast %230 : vector<1x1xf32> to vector<1x8xf32>
    %232 = arith.subf %228, %231 : vector<1x8xf32>
    %233 = math.exp %232 : vector<1x8xf32>
    %cst_58 = arith.constant dense<0.000000e+00> : vector<1xf32>
    %234 = vector.multi_reduction <add>, %233, %cst_58 [1] : vector<1x8xf32> to vector<1xf32>
    %235 = vector.shape_cast %234 : vector<1xf32> to vector<1x1xf32>
    %236 = tpu.reciprocal %235 {approx = true} : vector<1x1xf32> -> vector<1x1xf32>
    %237 = vector.broadcast %236 : vector<1x1xf32> to vector<1x8xf32>
    %238 = arith.mulf %233, %237 : vector<1x8xf32>
    %c0_59 = arith.constant 0 : index
    %c0_60 = arith.constant 0 : index
    %239 = vector.load %arg5[%c0_59, %c0_60] : memref<1x8xf32, #tpu.memory_space<vmem>>, vector<1x8xf32>
    tpu.vector_store %arg5[%c0_59, %c0_60], %238 {strides = array<i32>} : memref<1x8xf32, #tpu.memory_space<vmem>>, vector<1x8xf32>,
    %cst_61 = arith.constant dense<0.000000e+00> : vector<1x32xf32>
    %240 = tpu.matmul %238, %204, %cst_61 {dimension_numbers = #tpu.dot_dimension_numbers<[1], [0], [0], [1], [0, 0, 1, 1], [], []>} : vector<1x8xf32>, vector<8x32xf32>, vector<1x32xf32> -> vector<1x32xf32>
    %cst_62 = arith.constant dense<0.000000e+00> : vector<1x4xf32>
    %241 = tpu.matmul %240, %9, %cst_62 {dimension_numbers = #tpu.dot_dimension_numbers<[1], [0], [0], [1], [0, 0, 1, 1], [], []>} : vector<1x32xf32>, vector<32x4xf32>, vector<1x4xf32> -> vector<1x4xf32>
    %242 = arith.addf %241, %10 : vector<1x4xf32>
    %c0_63 = arith.constant 0 : index
    %c0_64 = arith.constant 0 : index
    %243 = vector.load %arg4[%c0_63, %c0_64] : memref<1x4xf32, #tpu.memory_space<vmem>>, vector<1x4xf32>
    tpu.vector_store %arg4[%c0_63, %c0_64], %242 {strides = array<i32>} : memref<1x4xf32, #tpu.memory_space<vmem>>, vector<1x4xf32>,
    return
  }
}

</mosaic_0001>

<llo_original>
// kernel: rnn_model_forward.1
$region0: #{rnn_model_forward.1}
  #allocation0 [shape = 'u32[]', space=smem, size = 0x4, offset = 0x4, fixed_abs, tag = 'smem constant byte address 0x4 - core index']
  #allocation1 [shape = 'u32[144,128]{1,0:T(1,128)}', space=vmem, size = 0x12000, scoped, tag = 'internal scratch']
  #allocation2 [shape = 'f32[8,32]{1,0:T(8,128)}', space=vmem, size = 0x1000, scoped, tag = 'scratch operand']
  %s0 = inlined_call_operand.vmem [shape: f32[8,4], index: 0, kind: input, shape index: {}]
  %s1 = inlined_call_operand.vmem [shape: f32[38,96], index: 1, kind: input, shape index: {}]
  %s2 = inlined_call_operand.vmem [shape: f32[35,32], index: 2, kind: input, shape index: {}]
  %s3 = inlined_call_operand.vmem [shape: f32[33,4], index: 3, kind: input, shape index: {}]
  %s4 = inlined_call_operand.hbm [shape: f32[1,4], index: 4, kind: output, shape index: {0}]
  %s5 = inlined_call_operand.vmem [shape: f32[1,8], index: 5, kind: output, shape index: {1}]
  %6 = xla_tuple %s4, %s5
  %s7 = sld [smem:[#allocation0]]
  $region34: #{rnn_model_forward.1} parent=0
    _
  %s9 = ssub.s32 1, %s7
  %s10 = scalar_select 0, %s9, %s7
  $region1: #{rnn_model_forward.1} parent=0
    #allocation3 [shape = 'u8[512]{0}', space=vmem, size = 0x400, scoped, tag = 'output window, operand 0, single buffered']
    #allocation4 [shape = 's32[1]{0}', space=sflag, size = 0x4, scoped, tag = 'scoped memory for rnn_model_forward.1']
    %11 = vsyncpa [#allocation4], 0
    // Predicated region
    $region2: #{rnn_model_forward.1} parent=1 // pred_check
      _
    $region3: #{rnn_model_forward.1} parent=1 // pred_check_branch
      %13 = sbr.rel (0) target = $region5
    $region4: #{rnn_model_forward.1} parent=1 // pred_region
      _
    $region5: #{rnn_model_forward.1} parent=1 // pred_fallthru
      _
    // Predicated region
    $region6: #{rnn_model_forward.1} parent=1 // pred_check
      _
    $region7: #{rnn_model_forward.1} parent=1 // pred_check_branch
      %15 = sbr.rel (0) target = $region9
    $region8: #{rnn_model_forward.1} parent=1 // pred_region
      _
    $region9: #{rnn_model_forward.1} parent=1 // pred_fallthru
      _
    // Predicated region
    $region10: #{rnn_model_forward.1} parent=1 // pred_check
      _
    $region11: #{rnn_model_forward.1} parent=1 // pred_check_branch
      %17 = sbr.rel (0) target = $region13
    $region12: #{rnn_model_forward.1} parent=1 // pred_region
      _
    $region13: #{rnn_model_forward.1} parent=1 // pred_fallthru
      _
    // Predicated region
    $region14: #{rnn_model_forward.1} parent=1 // pred_check
      _
    $region15: #{rnn_model_forward.1} parent=1 // pred_check_branch
      %19 = sbr.rel (0) target = $region17
    $region16: #{rnn_model_forward.1} parent=1 // pred_region
      _
    $region17: #{rnn_model_forward.1} parent=1 // pred_fallthru
      _
    %v20 = vld [vmem:[%s1] sm:$0xf]
    %v21 = vld [vmem:[%s1 + $0x4] sm:$0xff]
    %v22 = vld [vmem:[%s1 + $0xc] sm:$0xff]
    %v23 = vld [vmem:[%s1 + $0x14] sm:$0xff]
    %v24 = vld [vmem:[%s1 + $0x1c] sm:$0xff]
    %v25 = vld [vmem:[%s1 + $0x24] sm:$0x1]
    %v26 = vld [vmem:[%s1 + $0x25] sm:$0x1]
    %v27 = vld [vmem:[%s2] sm:$0xff]
    %v28 = vld [vmem:[%s2 + $0x8] sm:$0xff]
    %v29 = vld [vmem:[%s2 + $0x10] sm:$0xff]
    %v30 = vld [vmem:[%s2 + $0x18] sm:$0xff]
    %v31 = vld [vmem:[%s2 + $0x20] sm:$0x1]
    %v32 = vld [vmem:[%s2 + $0x21] sm:$0x1]
    %v33 = vld [vmem:[%s2 + $0x22] sm:$0x1]
    %v34 = vld [vmem:[%s3] sm:$0xff]
    %v35 = vld [vmem:[%s3 + $0x8] sm:$0xff]
    %v36 = vld [vmem:[%s3 + $0x10] sm:$0xff]
    %v37 = vld [vmem:[%s3 + $0x18] sm:$0xff]
    %v38 = vld [vmem:[%s3 + $0x20] sm:$0x1]
    %v39 = vld [vmem:[%s0] sm:$0xff]
    %v40 = vlaneseq
    %v41 = vshrl.u32 %v40, 7
    %v42 = vsub.s32 0, %v41
    %v43 = vrot.slane %v25, %v42
    %vm44 = vcmask 31744
    %v46 = vsel %vm44, %v39, 0
    %vm48 = vcmask 1043456
    %v50 = vsel %vm48, %v20, 0
    %52 = vmatprep.subr.mxu0 0.0
    %53 = vmatpush1.msra.mxu0 %v50
    %54 = vmatprep.subr.mxu0 0.0
    %55 = vmatpush1.msra.mxu0 0.0
    %56 = vmatprep.subr.mxu0 0.0
    %57 = vmatpush1.msra.mxu0 0.0
    %58 = vmatprep.subr.mxu0 0.0
    %59 = vmatpush1.msra.mxu0 0.0
    %60 = vmatprep.subr.mxu0 0.0
    %61 = vmatpush1.msra.mxu0 0.0
    %62 = vmatprep.subr.mxu0 0.0
    %63 = vmatpush1.msra.mxu0 0.0
    %64 = vmatprep.subr.mxu0 0.0
    %65 = vmatpush1.msra.mxu0 0.0
    %66 = vmatprep.subr.mxu0 0.0
    %67 = vmatpush1.msra.mxu0 0.0
    %68 = vmatprep.subr.mxu0 0.0
    %69 = vmatpush1.msra.mxu0 0.0
    %70 = vmatprep.subr.mxu0 0.0
    %71 = vmatpush1.msra.mxu0 0.0
    %72 = vmatprep.subr.mxu0 0.0
    %73 = vmatpush1.msra.mxu0 0.0
    %74 = vmatprep.subr.mxu0 0.0
    %75 = vmatpush1.msra.mxu0 0.0
    %76 = vmatprep.subr.mxu0 0.0
    %77 = vmatpush1.msra.mxu0 0.0
    %78 = vmatprep.subr.mxu0 0.0
    %79 = vmatpush1.msra.mxu0 0.0
    %80 = vmatprep.subr.mxu0 0.0
    %81 = vmatpush1.msra.mxu0 0.0
    %82 = vmatprep.subr.mxu0 0.0
    %83 = vmatpush1.msra.mxu0 0.0
    %84 = vmatprep.subr.mxu0 0.0
    %85 = vmatpush1.msra.mxu0 0.0
    %86 = vmatprep.subr.mxu0 0.0
    %87 = vmatpush1.msra.mxu0 0.0
    %88 = vmatprep.subr.mxu0 0.0
    %89 = vmatpush1.msra.mxu0 0.0
    %90 = vmatprep.subr.mxu0 0.0
    %91 = vmatpush1.msra.mxu0 0.0
    %92 = vmatprep.subr.mxu0 0.0
    %93 = vmatpush1.msra.mxu0 0.0
    %94 = vmatprep.subr.mxu0 0.0
    %95 = vmatpush1.msra.mxu0 0.0
    %96 = vmatprep.subr.mxu0 0.0
    %97 = vmatpush1.msra.mxu0 0.0
    %98 = vmatprep.subr.mxu0 0.0
    %99 = vmatpush1.msra.mxu0 0.0
    %100 = vmatprep.subr.mxu0 0.0
    %101 = vmatpush1.msra.mxu0 0.0
    %102 = vmatprep.subr.mxu0 0.0
    %103 = vmatpush1.msra.mxu0 0.0
    %104 = vmatprep.subr.mxu0 0.0
    %105 = vmatpush1.msra.mxu0 0.0
    %106 = vmatprep.subr.mxu0 0.0
    %107 = vmatpush1.msra.mxu0 0.0
    %108 = vmatprep.subr.mxu0 0.0
    %109 = vmatpush1.msra.mxu0 0.0
    %110 = vmatprep.subr.mxu0 0.0
    %111 = vmatpush1.msra.mxu0 0.0
    %112 = vmatprep.subr.mxu0 0.0
    %113 = vmatpush1.msra.mxu0 0.0
    %114 = vmatprep.subr.mxu0 0.0
    %115 = vmatpush1.msra.mxu0 0.0
    %116 = vmatprep.mubr.f32.mxu0 0.0
    %117 = vmatmul.mubr.f32.gmra.mrb[0].mxu0 %v46
    %v118 = vpop.f32.mrb[0].mxu0
    %v119 = vadd.f32 %v43, %v118
    %v120 = vpop.f32.mrb[0].mxu0
    %121 = vdwg.mxu0
    %v122 = vlaneseq
    %v123 = vshrl.u32 %v122, 7
    %v124 = vsub.s32 0, %v123
    %v125 = vrot.slane %v26, %v124
    %v126 = vadd.f32 %v119, %v125
    %vm127 = vcmask 261120
    %v129 = vsel %vm127, %v33, 0
    %131 = vmatprep.subr.mxu0 0.0
    %132 = vmatpush1.msra.mxu0 %v21
    %133 = vmatprep.subr.mxu0 0.0
    %134 = vmatpush1.msra.mxu0 %v22
    %135 = vmatprep.subr.mxu0 0.0
    %136 = vmatpush1.msra.mxu0 %v23
    %137 = vmatprep.subr.mxu0 0.0
    %138 = vmatpush1.msra.mxu0 %v24
    %139 = vmatprep.subr.mxu0 0.0
    %140 = vmatpush1.msra.mxu0 0.0
    %141 = vmatprep.subr.mxu0 0.0
    %142 = vmatpush1.msra.mxu0 0.0
    %143 = vmatprep.subr.mxu0 0.0
    %144 = vmatpush1.msra.mxu0 0.0
    %145 = vmatprep.subr.mxu0 0.0
    %146 = vmatpush1.msra.mxu0 0.0
    %147 = vmatprep.subr.mxu0 0.0
    %148 = vmatpush1.msra.mxu0 0.0
    %149 = vmatprep.subr.mxu0 0.0
    %150 = vmatpush1.msra.mxu0 0.0
    %151 = vmatprep.subr.mxu0 0.0
    %152 = vmatpush1.msra.mxu0 0.0
    %153 = vmatprep.subr.mxu0 0.0
    %154 = vmatpush1.msra.mxu0 0.0
    %155 = vmatprep.subr.mxu0 0.0
    %156 = vmatpush1.msra.mxu0 0.0
    %157 = vmatprep.subr.mxu0 0.0
    %158 = vmatpush1.msra.mxu0 0.0
    %159 = vmatprep.subr.mxu0 0.0
    %160 = vmatpush1.msra.mxu0 0.0
    %161 = vmatprep.subr.mxu0 0.0
    %162 = vmatpush1.msra.mxu0 0.0
    %163 = vmatprep.subr.mxu0 0.0
    %164 = vmatpush1.msra.mxu0 0.0
    %165 = vmatprep.subr.mxu0 0.0
    %166 = vmatpush1.msra.mxu0 0.0
    %167 = vmatprep.subr.mxu0 0.0
    %168 = vmatpush1.msra.mxu0 0.0
    %169 = vmatprep.subr.mxu0 0.0
    %170 = vmatpush1.msra.mxu0 0.0
    %171 = vmatprep.subr.mxu0 0.0
    %172 = vmatpush1.msra.mxu0 0.0
    %173 = vmatprep.subr.mxu0 0.0
    %174 = vmatpush1.msra.mxu0 0.0
    %175 = vmatprep.subr.mxu0 0.0
    %176 = vmatpush1.msra.mxu0 0.0
    %177 = vmatprep.subr.mxu0 0.0
    %178 = vmatpush1.msra.mxu0 0.0
    %179 = vmatprep.subr.mxu0 0.0
    %180 = vmatpush1.msra.mxu0 0.0
    %181 = vmatprep.subr.mxu0 0.0
    %182 = vmatpush1.msra.mxu0 0.0
    %183 = vmatprep.subr.mxu0 0.0
    %184 = vmatpush1.msra.mxu0 0.0
    %185 = vmatprep.subr.mxu0 0.0
    %186 = vmatpush1.msra.mxu0 0.0
    %187 = vmatprep.subr.mxu0 0.0
    %188 = vmatpush1.msra.mxu0 0.0
    %189 = vmatprep.subr.mxu0 0.0
    %190 = vmatpush1.msra.mxu0 0.0
    %191 = vmatprep.subr.mxu0 0.0
    %192 = vmatpush1.msra.mxu0 0.0
    %193 = vmatprep.subr.mxu0 0.0
    %194 = vmatpush1.msra.mxu0 0.0
    %195 = vmatprep.mubr.f32.mxu0 0.0
    %196 = vmatmul.mubr.f32.gmra.mrb[0].mxu0 %v129
    %v197 = vpop.f32.mrb[0].mxu0
    %v198 = vadd.f32 0.0, %v197
    %v199 = vpop.f32.mrb[0].mxu0
    %200 = vdwg.mxu0
    %v201 = vadd.f32 %v126, %v198
    %v202 = vxor.u32 %v201, 2147483648
    %v203 = vmul.f32 %v202, 1.442695
    %v204 = vpow.pop %v203
    %v205 = vadd.f32 %v204, 1.0
    %v206 = vrcp.pop %v205
    %v207 = vmul.f32 1.0, %v206
    %v208 = vadd.f32 %v198, %v26
    %210 = vrot.lane.b32.xlu0 %v208, 64
    %v211 = vpop.permute.xlu0 %210
    %v213 = vmul.f32 %v207, %v211
    %215 = vrot.lane.b32.xlu0 %v213, 64
    %v216 = vpop.permute.xlu0 %215
    %v218 = vadd.f32 %v119, %v216
    %v219 = vtanh.pop %v218
    %v220 = vsub.f32 1.0, %v207
    %222 = vrot.lane.b32.xlu0 %v219, 96
    %v223 = vpop.permute.xlu0 %222
    %v225 = vmul.f32 %v220, %v223
    %226 = vrot.lane.b32.xlu0 %v33, 32
    %v227 = vpop.permute.xlu0 %226
    %v229 = vmul.f32 %v207, %v227
    %v230 = vadd.f32 %v225, %v229
    %232 = vrot.lane.b32.xlu0 %v230, 96
    %v233 = vpop.permute.xlu0 %232
    %vm235 = vcmask 253952
    %236 = vst.msk [vmem:[#allocation2] sm:$0x1] %vm235, %v233
    %v237 = vsel %vm127, %v233, 0
    %239 = vmatprep.subr.mxu0 0.0
    %240 = vmatpush1.msra.mxu0 %v21
    %241 = vmatprep.subr.mxu0 0.0
    %242 = vmatpush1.msra.mxu0 %v22
    %243 = vmatprep.subr.mxu0 0.0
    %244 = vmatpush1.msra.mxu0 %v23
    %245 = vmatprep.subr.mxu0 0.0
    %246 = vmatpush1.msra.mxu0 %v24
    %247 = vmatprep.subr.mxu0 0.0
    %248 = vmatpush1.msra.mxu0 0.0
    %249 = vmatprep.subr.mxu0 0.0
    %250 = vmatpush1.msra.mxu0 0.0
    %251 = vmatprep.subr.mxu0 0.0
    %252 = vmatpush1.msra.mxu0 0.0
    %253 = vmatprep.subr.mxu0 0.0
    %254 = vmatpush1.msra.mxu0 0.0
    %255 = vmatprep.subr.mxu0 0.0
    %256 = vmatpush1.msra.mxu0 0.0
    %257 = vmatprep.subr.mxu0 0.0
    %258 = vmatpush1.msra.mxu0 0.0
    %259 = vmatprep.subr.mxu0 0.0
    %260 = vmatpush1.msra.mxu0 0.0
    %261 = vmatprep.subr.mxu0 0.0
    %262 = vmatpush1.msra.mxu0 0.0
    %263 = vmatprep.subr.mxu0 0.0
    %264 = vmatpush1.msra.mxu0 0.0
    %265 = vmatprep.subr.mxu0 0.0
    %266 = vmatpush1.msra.mxu0 0.0
    %267 = vmatprep.subr.mxu0 0.0
    %268 = vmatpush1.msra.mxu0 0.0
    %269 = vmatprep.subr.mxu0 0.0
    %270 = vmatpush1.msra.mxu0 0.0
    %271 = vmatprep.subr.mxu0 0.0
    %272 = vmatpush1.msra.mxu0 0.0
    %273 = vmatprep.subr.mxu0 0.0
    %274 = vmatpush1.msra.mxu0 0.0
    %275 = vmatprep.subr.mxu0 0.0
    %276 = vmatpush1.msra.mxu0 0.0
    %277 = vmatprep.subr.mxu0 0.0
    %278 = vmatpush1.msra.mxu0 0.0
    %279 = vmatprep.subr.mxu0 0.0
    %280 = vmatpush1.msra.mxu0 0.0
    %281 = vmatprep.subr.mxu0 0.0
    %282 = vmatpush1.msra.mxu0 0.0
    %283 = vmatprep.subr.mxu0 0.0
    %284 = vmatpush1.msra.mxu0 0.0
    %285 = vmatprep.subr.mxu0 0.0
    %286 = vmatpush1.msra.mxu0 0.0
    %287 = vmatprep.subr.mxu0 0.0
    %288 = vmatpush1.msra.mxu0 0.0
    %289 = vmatprep.subr.mxu0 0.0
    %290 = vmatpush1.msra.mxu0 0.0
    %291 = vmatprep.subr.mxu0 0.0
    %292 = vmatpush1.msra.mxu0 0.0
    %293 = vmatprep.subr.mxu0 0.0
    %294 = vmatpush1.msra.mxu0 0.0
    %295 = vmatprep.subr.mxu0 0.0
    %296 = vmatpush1.msra.mxu0 0.0
    %297 = vmatprep.subr.mxu0 0.0
    %298 = vmatpush1.msra.mxu0 0.0
    %299 = vmatprep.subr.mxu0 0.0
    %300 = vmatpush1.msra.mxu0 0.0
    %301 = vmatprep.subr.mxu0 0.0
    %302 = vmatpush1.msra.mxu0 0.0
    %303 = vmatprep.mubr.f32.mxu0 0.0
    %304 = vmatmul.mubr.f32.gmra.mrb[0].mxu0 %v237
    %v305 = vpop.f32.mrb[0].mxu0
    %v306 = vadd.f32 0.0, %v305
    %v307 = vpop.f32.mrb[0].mxu0
    %308 = vdwg.mxu0
    %v310 = vrot.slane %v306, 7
    %v312 = vadd.f32 %v126, %v310
    %v313 = vxor.u32 %v312, 2147483648
    %v314 = vmul.f32 %v313, 1.442695
    %v315 = vpow.pop %v314
    %v316 = vadd.f32 %v315, 1.0
    %v317 = vrcp.pop %v316
    %v318 = vmul.f32 1.0, %v317
    %v319 = vadd.f32 %v306, %v26
    %v321 = vrot.slane %v319, 7
    %322 = vrot.lane.b32.xlu0 %v321, 64
    %v323 = vpop.permute.xlu0 %322
    %v325 = vmul.f32 %v318, %v323
    %327 = vrot.lane.b32.xlu0 %v325, 64
    %v328 = vpop.permute.xlu0 %327
    %v330 = vadd.f32 %v119, %v328
    %v331 = vtanh.pop %v330
    %v332 = vsub.f32 1.0, %v318
    %334 = vrot.lane.b32.xlu0 %v331, 96
    %v335 = vpop.permute.xlu0 %334
    %v337 = vmul.f32 %v332, %v335
    %v338 = vrot.slane %v230, 7
    %v340 = vmul.f32 %v318, %v338
    %v341 = vadd.f32 %v337, %v340
    %343 = vrot.lane.b32.xlu0 %v341, 96
    %v344 = vpop.permute.xlu0 %343
    %vm346 = vcmask 254977
    %347 = vst.msk [vmem:[#allocation2] sm:$0x2] %vm346, %v344
    %v348 = vrot.slane %v341, 1
    %349 = vrot.lane.b32.xlu0 %v348, 96
    %v350 = vpop.permute.xlu0 %349
    %v351 = vsel %vm127, %v350, 0
    %353 = vmatprep.subr.mxu0 0.0
    %354 = vmatpush1.msra.mxu0 %v21
    %355 = vmatprep.subr.mxu0 0.0
    %356 = vmatpush1.msra.mxu0 %v22
    %357 = vmatprep.subr.mxu0 0.0
    %358 = vmatpush1.msra.mxu0 %v23
    %359 = vmatprep.subr.mxu0 0.0
    %360 = vmatpush1.msra.mxu0 %v24
    %361 = vmatprep.subr.mxu0 0.0
    %362 = vmatpush1.msra.mxu0 0.0
    %363 = vmatprep.subr.mxu0 0.0
    %364 = vmatpush1.msra.mxu0 0.0
    %365 = vmatprep.subr.mxu0 0.0
    %366 = vmatpush1.msra.mxu0 0.0
    %367 = vmatprep.subr.mxu0 0.0
    %368 = vmatpush1.msra.mxu0 0.0
    %369 = vmatprep.subr.mxu0 0.0
    %370 = vmatpush1.msra.mxu0 0.0
    %371 = vmatprep.subr.mxu0 0.0
    %372 = vmatpush1.msra.mxu0 0.0
    %373 = vmatprep.subr.mxu0 0.0
    %374 = vmatpush1.msra.mxu0 0.0
    %375 = vmatprep.subr.mxu0 0.0
    %376 = vmatpush1.msra.mxu0 0.0
    %377 = vmatprep.subr.mxu0 0.0
    %378 = vmatpush1.msra.mxu0 0.0
    %379 = vmatprep.subr.mxu0 0.0
    %380 = vmatpush1.msra.mxu0 0.0
    %381 = vmatprep.subr.mxu0 0.0
    %382 = vmatpush1.msra.mxu0 0.0
    %383 = vmatprep.subr.mxu0 0.0
    %384 = vmatpush1.msra.mxu0 0.0
    %385 = vmatprep.subr.mxu0 0.0
    %386 = vmatpush1.msra.mxu0 0.0
    %387 = vmatprep.subr.mxu0 0.0
    %388 = vmatpush1.msra.mxu0 0.0
    %389 = vmatprep.subr.mxu0 0.0
    %390 = vmatpush1.msra.mxu0 0.0
    %391 = vmatprep.subr.mxu0 0.0
    %392 = vmatpush1.msra.mxu0 0.0
    %393 = vmatprep.subr.mxu0 0.0
    %394 = vmatpush1.msra.mxu0 0.0
    %395 = vmatprep.subr.mxu0 0.0
    %396 = vmatpush1.msra.mxu0 0.0
    %397 = vmatprep.subr.mxu0 0.0
    %398 = vmatpush1.msra.mxu0 0.0
    %399 = vmatprep.subr.mxu0 0.0
    %400 = vmatpush1.msra.mxu0 0.0
    %401 = vmatprep.subr.mxu0 0.0
    %402 = vmatpush1.msra.mxu0 0.0
    %403 = vmatprep.subr.mxu0 0.0
    %404 = vmatpush1.msra.mxu0 0.0
    %405 = vmatprep.subr.mxu0 0.0
    %406 = vmatpush1.msra.mxu0 0.0
    %407 = vmatprep.subr.mxu0 0.0
    %408 = vmatpush1.msra.mxu0 0.0
    %409 = vmatprep.subr.mxu0 0.0
    %410 = vmatpush1.msra.mxu0 0.0
    %411 = vmatprep.subr.mxu0 0.0
    %412 = vmatpush1.msra.mxu0 0.0
    %413 = vmatprep.subr.mxu0 0.0
    %414 = vmatpush1.msra.mxu0 0.0
    %415 = vmatprep.subr.mxu0 0.0
    %416 = vmatpush1.msra.mxu0 0.0
    %417 = vmatprep.mubr.f32.mxu0 0.0
    %418 = vmatmul.mubr.f32.gmra.mrb[0].mxu0 %v351
    %v419 = vpop.f32.mrb[0].mxu0
    %v420 = vadd.f32 0.0, %v419
    %v421 = vpop.f32.mrb[0].mxu0
    %422 = vdwg.mxu0
    %v424 = vrot.slane %v420, 6
    %v426 = vadd.f32 %v126, %v424
    %v427 = vxor.u32 %v426, 2147483648
    %v428 = vmul.f32 %v427, 1.442695
    %v429 = vpow.pop %v428
    %v430 = vadd.f32 %v429, 1.0
    %v431 = vrcp.pop %v430
    %v432 = vmul.f32 1.0, %v431
    %v433 = vadd.f32 %v420, %v26
    %v435 = vrot.slane %v433, 6
    %436 = vrot.lane.b32.xlu0 %v435, 64
    %v437 = vpop.permute.xlu0 %436
    %v439 = vmul.f32 %v432, %v437
    %441 = vrot.lane.b32.xlu0 %v439, 64
    %v442 = vpop.permute.xlu0 %441
    %v444 = vadd.f32 %v119, %v442
    %v445 = vtanh.pop %v444
    %v446 = vsub.f32 1.0, %v432
    %448 = vrot.lane.b32.xlu0 %v445, 96
    %v449 = vpop.permute.xlu0 %448
    %v451 = vmul.f32 %v446, %v449
    %v452 = vrot.slane %v341, 7
    %v454 = vmul.f32 %v432, %v452
    %v455 = vadd.f32 %v451, %v454
    %457 = vrot.lane.b32.xlu0 %v455, 96
    %v458 = vpop.permute.xlu0 %457
    %vm460 = vcmask 256002
    %461 = vst.msk [vmem:[#allocation2] sm:$0x4] %vm460, %v458
    %v462 = vrot.slane %v455, 2
    %463 = vrot.lane.b32.xlu0 %v462, 96
    %v464 = vpop.permute.xlu0 %463
    %v465 = vsel %vm127, %v464, 0
    %467 = vmatprep.subr.mxu0 0.0
    %468 = vmatpush1.msra.mxu0 %v21
    %469 = vmatprep.subr.mxu0 0.0
    %470 = vmatpush1.msra.mxu0 %v22
    %471 = vmatprep.subr.mxu0 0.0
    %472 = vmatpush1.msra.mxu0 %v23
    %473 = vmatprep.subr.mxu0 0.0
    %474 = vmatpush1.msra.mxu0 %v24
    %475 = vmatprep.subr.mxu0 0.0
    %476 = vmatpush1.msra.mxu0 0.0
    %477 = vmatprep.subr.mxu0 0.0
    %478 = vmatpush1.msra.mxu0 0.0
    %479 = vmatprep.subr.mxu0 0.0
    %480 = vmatpush1.msra.mxu0 0.0
    %481 = vmatprep.subr.mxu0 0.0
    %482 = vmatpush1.msra.mxu0 0.0
    %483 = vmatprep.subr.mxu0 0.0
    %484 = vmatpush1.msra.mxu0 0.0
    %485 = vmatprep.subr.mxu0 0.0
    %486 = vmatpush1.msra.mxu0 0.0
    %487 = vmatprep.subr.mxu0 0.0
    %488 = vmatpush1.msra.mxu0 0.0
    %489 = vmatprep.subr.mxu0 0.0
    %490 = vmatpush1.msra.mxu0 0.0
    %491 = vmatprep.subr.mxu0 0.0
    %492 = vmatpush1.msra.mxu0 0.0
    %493 = vmatprep.subr.mxu0 0.0
    %494 = vmatpush1.msra.mxu0 0.0
    %495 = vmatprep.subr.mxu0 0.0
    %496 = vmatpush1.msra.mxu0 0.0
    %497 = vmatprep.subr.mxu0 0.0
    %498 = vmatpush1.msra.mxu0 0.0
    %499 = vmatprep.subr.mxu0 0.0
    %500 = vmatpush1.msra.mxu0 0.0
    %501 = vmatprep.subr.mxu0 0.0
    %502 = vmatpush1.msra.mxu0 0.0
    %503 = vmatprep.subr.mxu0 0.0
    %504 = vmatpush1.msra.mxu0 0.0
    %505 = vmatprep.subr.mxu0 0.0
    %506 = vmatpush1.msra.mxu0 0.0
    %507 = vmatprep.subr.mxu0 0.0
    %508 = vmatpush1.msra.mxu0 0.0
    %509 = vmatprep.subr.mxu0 0.0
    %510 = vmatpush1.msra.mxu0 0.0
    %511 = vmatprep.subr.mxu0 0.0
    %512 = vmatpush1.msra.mxu0 0.0
    %513 = vmatprep.subr.mxu0 0.0
    %514 = vmatpush1.msra.mxu0 0.0
    %515 = vmatprep.subr.mxu0 0.0
    %516 = vmatpush1.msra.mxu0 0.0
    %517 = vmatprep.subr.mxu0 0.0
    %518 = vmatpush1.msra.mxu0 0.0
    %519 = vmatprep.subr.mxu0 0.0
    %520 = vmatpush1.msra.mxu0 0.0
    %521 = vmatprep.subr.mxu0 0.0
    %522 = vmatpush1.msra.mxu0 0.0
    %523 = vmatprep.subr.mxu0 0.0
    %524 = vmatpush1.msra.mxu0 0.0
    %525 = vmatprep.subr.mxu0 0.0
    %526 = vmatpush1.msra.mxu0 0.0
    %527 = vmatprep.subr.mxu0 0.0
    %528 = vmatpush1.msra.mxu0 0.0
    %529 = vmatprep.subr.mxu0 0.0
    %530 = vmatpush1.msra.mxu0 0.0
    %531 = vmatprep.mubr.f32.mxu0 0.0
    %532 = vmatmul.mubr.f32.gmra.mrb[0].mxu0 %v465
    %v533 = vpop.f32.mrb[0].mxu0
    %v534 = vadd.f32 0.0, %v533
    %v535 = vpop.f32.mrb[0].mxu0
    %536 = vdwg.mxu0
    %v538 = vrot.slane %v534, 5
    %v540 = vadd.f32 %v126, %v538
    %v541 = vxor.u32 %v540, 2147483648
    %v542 = vmul.f32 %v541, 1.442695
    %v543 = vpow.pop %v542
    %v544 = vadd.f32 %v543, 1.0
    %v545 = vrcp.pop %v544
    %v546 = vmul.f32 1.0, %v545
    %v547 = vadd.f32 %v534, %v26
    %v549 = vrot.slane %v547, 5
    %550 = vrot.lane.b32.xlu0 %v549, 64
    %v551 = vpop.permute.xlu0 %550
    %v553 = vmul.f32 %v546, %v551
    %555 = vrot.lane.b32.xlu0 %v553, 64
    %v556 = vpop.permute.xlu0 %555
    %v558 = vadd.f32 %v119, %v556
    %v559 = vtanh.pop %v558
    %v560 = vsub.f32 1.0, %v546
    %562 = vrot.lane.b32.xlu0 %v559, 96
    %v563 = vpop.permute.xlu0 %562
    %v565 = vmul.f32 %v560, %v563
    %v566 = vrot.slane %v455, 7
    %v568 = vmul.f32 %v546, %v566
    %v569 = vadd.f32 %v565, %v568
    %571 = vrot.lane.b32.xlu0 %v569, 96
    %v572 = vpop.permute.xlu0 %571
    %vm574 = vcmask 257027
    %575 = vst.msk [vmem:[#allocation2] sm:$0x8] %vm574, %v572
    %v576 = vrot.slane %v569, 3
    %577 = vrot.lane.b32.xlu0 %v576, 96
    %v578 = vpop.permute.xlu0 %577
    %v579 = vsel %vm127, %v578, 0
    %581 = vmatprep.subr.mxu0 0.0
    %582 = vmatpush1.msra.mxu0 %v21
    %583 = vmatprep.subr.mxu0 0.0
    %584 = vmatpush1.msra.mxu0 %v22
    %585 = vmatprep.subr.mxu0 0.0
    %586 = vmatpush1.msra.mxu0 %v23
    %587 = vmatprep.subr.mxu0 0.0
    %588 = vmatpush1.msra.mxu0 %v24
    %589 = vmatprep.subr.mxu0 0.0
    %590 = vmatpush1.msra.mxu0 0.0
    %591 = vmatprep.subr.mxu0 0.0
    %592 = vmatpush1.msra.mxu0 0.0
    %593 = vmatprep.subr.mxu0 0.0
    %594 = vmatpush1.msra.mxu0 0.0
    %595 = vmatprep.subr.mxu0 0.0
    %596 = vmatpush1.msra.mxu0 0.0
    %597 = vmatprep.subr.mxu0 0.0
    %598 = vmatpush1.msra.mxu0 0.0
    %599 = vmatprep.subr.mxu0 0.0
    %600 = vmatpush1.msra.mxu0 0.0
    %601 = vmatprep.subr.mxu0 0.0
    %602 = vmatpush1.msra.mxu0 0.0
    %603 = vmatprep.subr.mxu0 0.0
    %604 = vmatpush1.msra.mxu0 0.0
    %605 = vmatprep.subr.mxu0 0.0
    %606 = vmatpush1.msra.mxu0 0.0
    %607 = vmatprep.subr.mxu0 0.0
    %608 = vmatpush1.msra.mxu0 0.0
    %609 = vmatprep.subr.mxu0 0.0
    %610 = vmatpush1.msra.mxu0 0.0
    %611 = vmatprep.subr.mxu0 0.0
    %612 = vmatpush1.msra.mxu0 0.0
    %613 = vmatprep.subr.mxu0 0.0
    %614 = vmatpush1.msra.mxu0 0.0
    %615 = vmatprep.subr.mxu0 0.0
    %616 = vmatpush1.msra.mxu0 0.0
    %617 = vmatprep.subr.mxu0 0.0
    %618 = vmatpush1.msra.mxu0 0.0
    %619 = vmatprep.subr.mxu0 0.0
    %620 = vmatpush1.msra.mxu0 0.0
    %621 = vmatprep.subr.mxu0 0.0
    %622 = vmatpush1.msra.mxu0 0.0
    %623 = vmatprep.subr.mxu0 0.0
    %624 = vmatpush1.msra.mxu0 0.0
    %625 = vmatprep.subr.mxu0 0.0
    %626 = vmatpush1.msra.mxu0 0.0
    %627 = vmatprep.subr.mxu0 0.0
    %628 = vmatpush1.msra.mxu0 0.0
    %629 = vmatprep.subr.mxu0 0.0
    %630 = vmatpush1.msra.mxu0 0.0
    %631 = vmatprep.subr.mxu0 0.0
    %632 = vmatpush1.msra.mxu0 0.0
    %633 = vmatprep.subr.mxu0 0.0
    %634 = vmatpush1.msra.mxu0 0.0
    %635 = vmatprep.subr.mxu0 0.0
    %636 = vmatpush1.msra.mxu0 0.0
    %637 = vmatprep.subr.mxu0 0.0
    %638 = vmatpush1.msra.mxu0 0.0
    %639 = vmatprep.subr.mxu0 0.0
    %640 = vmatpush1.msra.mxu0 0.0
    %641 = vmatprep.subr.mxu0 0.0
    %642 = vmatpush1.msra.mxu0 0.0
    %643 = vmatprep.subr.mxu0 0.0
    %644 = vmatpush1.msra.mxu0 0.0
    %645 = vmatprep.mubr.f32.mxu0 0.0
    %646 = vmatmul.mubr.f32.gmra.mrb[0].mxu0 %v579
    %v647 = vpop.f32.mrb[0].mxu0
    %v648 = vadd.f32 0.0, %v647
    %v649 = vpop.f32.mrb[0].mxu0
    %650 = vdwg.mxu0
    %v652 = vrot.slane %v648, 4
    %v654 = vadd.f32 %v126, %v652
    %v655 = vxor.u32 %v654, 2147483648
    %v656 = vmul.f32 %v655, 1.442695
    %v657 = vpow.pop %v656
    %v658 = vadd.f32 %v657, 1.0
    %v659 = vrcp.pop %v658
    %v660 = vmul.f32 1.0, %v659
    %v661 = vadd.f32 %v648, %v26
    %v663 = vrot.slane %v661, 4
    %664 = vrot.lane.b32.xlu0 %v663, 64
    %v665 = vpop.permute.xlu0 %664
    %v667 = vmul.f32 %v660, %v665
    %669 = vrot.lane.b32.xlu0 %v667, 64
    %v670 = vpop.permute.xlu0 %669
    %v672 = vadd.f32 %v119, %v670
    %v673 = vtanh.pop %v672
    %v674 = vsub.f32 1.0, %v660
    %676 = vrot.lane.b32.xlu0 %v673, 96
    %v677 = vpop.permute.xlu0 %676
    %v679 = vmul.f32 %v674, %v677
    %v680 = vrot.slane %v569, 7
    %v682 = vmul.f32 %v660, %v680
    %v683 = vadd.f32 %v679, %v682
    %685 = vrot.lane.b32.xlu0 %v683, 96
    %v686 = vpop.permute.xlu0 %685
    %vm688 = vcmask 258052
    %689 = vst.msk [vmem:[#allocation2] sm:$0x10] %vm688, %v686
    %v690 = vrot.slane %v683, 4
    %691 = vrot.lane.b32.xlu0 %v690, 96
    %v692 = vpop.permute.xlu0 %691
    %v693 = vsel %vm127, %v692, 0
    %695 = vmatprep.subr.mxu0 0.0
    %696 = vmatpush1.msra.mxu0 %v21
    %697 = vmatprep.subr.mxu0 0.0
    %698 = vmatpush1.msra.mxu0 %v22
    %699 = vmatprep.subr.mxu0 0.0
    %700 = vmatpush1.msra.mxu0 %v23
    %701 = vmatprep.subr.mxu0 0.0
    %702 = vmatpush1.msra.mxu0 %v24
    %703 = vmatprep.subr.mxu0 0.0
    %704 = vmatpush1.msra.mxu0 0.0
    %705 = vmatprep.subr.mxu0 0.0
    %706 = vmatpush1.msra.mxu0 0.0
    %707 = vmatprep.subr.mxu0 0.0
    %708 = vmatpush1.msra.mxu0 0.0
    %709 = vmatprep.subr.mxu0 0.0
    %710 = vmatpush1.msra.mxu0 0.0
    %711 = vmatprep.subr.mxu0 0.0
    %712 = vmatpush1.msra.mxu0 0.0
    %713 = vmatprep.subr.mxu0 0.0
    %714 = vmatpush1.msra.mxu0 0.0
    %715 = vmatprep.subr.mxu0 0.0
    %716 = vmatpush1.msra.mxu0 0.0
    %717 = vmatprep.subr.mxu0 0.0
    %718 = vmatpush1.msra.mxu0 0.0
    %719 = vmatprep.subr.mxu0 0.0
    %720 = vmatpush1.msra.mxu0 0.0
    %721 = vmatprep.subr.mxu0 0.0
    %722 = vmatpush1.msra.mxu0 0.0
    %723 = vmatprep.subr.mxu0 0.0
    %724 = vmatpush1.msra.mxu0 0.0
    %725 = vmatprep.subr.mxu0 0.0
    %726 = vmatpush1.msra.mxu0 0.0
    %727 = vmatprep.subr.mxu0 0.0
    %728 = vmatpush1.msra.mxu0 0.0
    %729 = vmatprep.subr.mxu0 0.0
    %730 = vmatpush1.msra.mxu0 0.0
    %731 = vmatprep.subr.mxu0 0.0
    %732 = vmatpush1.msra.mxu0 0.0
    %733 = vmatprep.subr.mxu0 0.0
    %734 = vmatpush1.msra.mxu0 0.0
    %735 = vmatprep.subr.mxu0 0.0
    %736 = vmatpush1.msra.mxu0 0.0
    %737 = vmatprep.subr.mxu0 0.0
    %738 = vmatpush1.msra.mxu0 0.0
    %739 = vmatprep.subr.mxu0 0.0
    %740 = vmatpush1.msra.mxu0 0.0
    %741 = vmatprep.subr.mxu0 0.0
    %742 = vmatpush1.msra.mxu0 0.0
    %743 = vmatprep.subr.mxu0 0.0
    %744 = vmatpush1.msra.mxu0 0.0
    %745 = vmatprep.subr.mxu0 0.0
    %746 = vmatpush1.msra.mxu0 0.0
    %747 = vmatprep.subr.mxu0 0.0
    %748 = vmatpush1.msra.mxu0 0.0
    %749 = vmatprep.subr.mxu0 0.0
    %750 = vmatpush1.msra.mxu0 0.0
    %751 = vmatprep.subr.mxu0 0.0
    %752 = vmatpush1.msra.mxu0 0.0
    %753 = vmatprep.subr.mxu0 0.0
    %754 = vmatpush1.msra.mxu0 0.0
    %755 = vmatprep.subr.mxu0 0.0
    %756 = vmatpush1.msra.mxu0 0.0
    %757 = vmatprep.subr.mxu0 0.0
    %758 = vmatpush1.msra.mxu0 0.0
    %759 = vmatprep.mubr.f32.mxu0 0.0
    %760 = vmatmul.mubr.f32.gmra.mrb[0].mxu0 %v693
    %v761 = vpop.f32.mrb[0].mxu0
    %v762 = vadd.f32 0.0, %v761
    %v763 = vpop.f32.mrb[0].mxu0
    %764 = vdwg.mxu0
    %v766 = vrot.slane %v762, 3
    %v768 = vadd.f32 %v126, %v766
    %v769 = vxor.u32 %v768, 2147483648
    %v770 = vmul.f32 %v769, 1.442695
    %v771 = vpow.pop %v770
    %v772 = vadd.f32 %v771, 1.0
    %v773 = vrcp.pop %v772
    %v774 = vmul.f32 1.0, %v773
    %v775 = vadd.f32 %v762, %v26
    %v777 = vrot.slane %v775, 3
    %778 = vrot.lane.b32.xlu0 %v777, 64
    %v779 = vpop.permute.xlu0 %778
    %v781 = vmul.f32 %v774, %v779
    %783 = vrot.lane.b32.xlu0 %v781, 64
    %v784 = vpop.permute.xlu0 %783
    %v786 = vadd.f32 %v119, %v784
    %v787 = vtanh.pop %v786
    %v788 = vsub.f32 1.0, %v774
    %790 = vrot.lane.b32.xlu0 %v787, 96
    %v791 = vpop.permute.xlu0 %790
    %v793 = vmul.f32 %v788, %v791
    %v794 = vrot.slane %v683, 7
    %v796 = vmul.f32 %v774, %v794
    %v797 = vadd.f32 %v793, %v796
    %799 = vrot.lane.b32.xlu0 %v797, 96
    %v800 = vpop.permute.xlu0 %799
    %vm802 = vcmask 259077
    %803 = vst.msk [vmem:[#allocation2] sm:$0x20] %vm802, %v800
    %v804 = vrot.slane %v797, 5
    %805 = vrot.lane.b32.xlu0 %v804, 96
    %v806 = vpop.permute.xlu0 %805
    %v807 = vsel %vm127, %v806, 0
    %809 = vmatprep.subr.mxu0 0.0
    %810 = vmatpush1.msra.mxu0 %v21
    %811 = vmatprep.subr.mxu0 0.0
    %812 = vmatpush1.msra.mxu0 %v22
    %813 = vmatprep.subr.mxu0 0.0
    %814 = vmatpush1.msra.mxu0 %v23
    %815 = vmatprep.subr.mxu0 0.0
    %816 = vmatpush1.msra.mxu0 %v24
    %817 = vmatprep.subr.mxu0 0.0
    %818 = vmatpush1.msra.mxu0 0.0
    %819 = vmatprep.subr.mxu0 0.0
    %820 = vmatpush1.msra.mxu0 0.0
    %821 = vmatprep.subr.mxu0 0.0
    %822 = vmatpush1.msra.mxu0 0.0
    %823 = vmatprep.subr.mxu0 0.0
    %824 = vmatpush1.msra.mxu0 0.0
    %825 = vmatprep.subr.mxu0 0.0
    %826 = vmatpush1.msra.mxu0 0.0
    %827 = vmatprep.subr.mxu0 0.0
    %828 = vmatpush1.msra.mxu0 0.0
    %829 = vmatprep.subr.mxu0 0.0
    %830 = vmatpush1.msra.mxu0 0.0
    %831 = vmatprep.subr.mxu0 0.0
    %832 = vmatpush1.msra.mxu0 0.0
    %833 = vmatprep.subr.mxu0 0.0
    %834 = vmatpush1.msra.mxu0 0.0
    %835 = vmatprep.subr.mxu0 0.0
    %836 = vmatpush1.msra.mxu0 0.0
    %837 = vmatprep.subr.mxu0 0.0
    %838 = vmatpush1.msra.mxu0 0.0
    %839 = vmatprep.subr.mxu0 0.0
    %840 = vmatpush1.msra.mxu0 0.0
    %841 = vmatprep.subr.mxu0 0.0
    %842 = vmatpush1.msra.mxu0 0.0
    %843 = vmatprep.subr.mxu0 0.0
    %844 = vmatpush1.msra.mxu0 0.0
    %845 = vmatprep.subr.mxu0 0.0
    %846 = vmatpush1.msra.mxu0 0.0
    %847 = vmatprep.subr.mxu0 0.0
    %848 = vmatpush1.msra.mxu0 0.0
    %849 = vmatprep.subr.mxu0 0.0
    %850 = vmatpush1.msra.mxu0 0.0
    %851 = vmatprep.subr.mxu0 0.0
    %852 = vmatpush1.msra.mxu0 0.0
    %853 = vmatprep.subr.mxu0 0.0
    %854 = vmatpush1.msra.mxu0 0.0
    %855 = vmatprep.subr.mxu0 0.0
    %856 = vmatpush1.msra.mxu0 0.0
    %857 = vmatprep.subr.mxu0 0.0
    %858 = vmatpush1.msra.mxu0 0.0
    %859 = vmatprep.subr.mxu0 0.0
    %860 = vmatpush1.msra.mxu0 0.0
    %861 = vmatprep.subr.mxu0 0.0
    %862 = vmatpush1.msra.mxu0 0.0
    %863 = vmatprep.subr.mxu0 0.0
    %864 = vmatpush1.msra.mxu0 0.0
    %865 = vmatprep.subr.mxu0 0.0
    %866 = vmatpush1.msra.mxu0 0.0
    %867 = vmatprep.subr.mxu0 0.0
    %868 = vmatpush1.msra.mxu0 0.0
    %869 = vmatprep.subr.mxu0 0.0
    %870 = vmatpush1.msra.mxu0 0.0
    %871 = vmatprep.subr.mxu0 0.0
    %872 = vmatpush1.msra.mxu0 0.0
    %873 = vmatprep.mubr.f32.mxu0 0.0
    %874 = vmatmul.mubr.f32.gmra.mrb[0].mxu0 %v807
    %v875 = vpop.f32.mrb[0].mxu0
    %v876 = vadd.f32 0.0, %v875
    %v877 = vpop.f32.mrb[0].mxu0
    %878 = vdwg.mxu0
    %v880 = vrot.slane %v876, 2
    %v882 = vadd.f32 %v126, %v880
    %v883 = vxor.u32 %v882, 2147483648
    %v884 = vmul.f32 %v883, 1.442695
    %v885 = vpow.pop %v884
    %v886 = vadd.f32 %v885, 1.0
    %v887 = vrcp.pop %v886
    %v888 = vmul.f32 1.0, %v887
    %v889 = vadd.f32 %v876, %v26
    %v891 = vrot.slane %v889, 2
    %892 = vrot.lane.b32.xlu0 %v891, 64
    %v893 = vpop.permute.xlu0 %892
    %v895 = vmul.f32 %v888, %v893
    %897 = vrot.lane.b32.xlu0 %v895, 64
    %v898 = vpop.permute.xlu0 %897
    %v900 = vadd.f32 %v119, %v898
    %v901 = vtanh.pop %v900
    %v902 = vsub.f32 1.0, %v888
    %904 = vrot.lane.b32.xlu0 %v901, 96
    %v905 = vpop.permute.xlu0 %904
    %v907 = vmul.f32 %v902, %v905
    %v908 = vrot.slane %v797, 7
    %v910 = vmul.f32 %v888, %v908
    %v911 = vadd.f32 %v907, %v910
    %913 = vrot.lane.b32.xlu0 %v911, 96
    %v914 = vpop.permute.xlu0 %913
    %vm916 = vcmask 260102
    %917 = vst.msk [vmem:[#allocation2] sm:$0x40] %vm916, %v914
    %v918 = vrot.slane %v911, 6
    %919 = vrot.lane.b32.xlu0 %v918, 96
    %v920 = vpop.permute.xlu0 %919
    %v921 = vsel %vm127, %v920, 0
    %923 = vmatprep.subr.mxu0 0.0
    %924 = vmatpush1.msra.mxu0 %v21
    %925 = vmatprep.subr.mxu0 0.0
    %926 = vmatpush1.msra.mxu0 %v22
    %927 = vmatprep.subr.mxu0 0.0
    %928 = vmatpush1.msra.mxu0 %v23
    %929 = vmatprep.subr.mxu0 0.0
    %930 = vmatpush1.msra.mxu0 %v24
    %931 = vmatprep.subr.mxu0 0.0
    %932 = vmatpush1.msra.mxu0 0.0
    %933 = vmatprep.subr.mxu0 0.0
    %934 = vmatpush1.msra.mxu0 0.0
    %935 = vmatprep.subr.mxu0 0.0
    %936 = vmatpush1.msra.mxu0 0.0
    %937 = vmatprep.subr.mxu0 0.0
    %938 = vmatpush1.msra.mxu0 0.0
    %939 = vmatprep.subr.mxu0 0.0
    %940 = vmatpush1.msra.mxu0 0.0
    %941 = vmatprep.subr.mxu0 0.0
    %942 = vmatpush1.msra.mxu0 0.0
    %943 = vmatprep.subr.mxu0 0.0
    %944 = vmatpush1.msra.mxu0 0.0
    %945 = vmatprep.subr.mxu0 0.0
    %946 = vmatpush1.msra.mxu0 0.0
    %947 = vmatprep.subr.mxu0 0.0
    %948 = vmatpush1.msra.mxu0 0.0
    %949 = vmatprep.subr.mxu0 0.0
    %950 = vmatpush1.msra.mxu0 0.0
    %951 = vmatprep.subr.mxu0 0.0
    %952 = vmatpush1.msra.mxu0 0.0
    %953 = vmatprep.subr.mxu0 0.0
    %954 = vmatpush1.msra.mxu0 0.0
    %955 = vmatprep.subr.mxu0 0.0
    %956 = vmatpush1.msra.mxu0 0.0
    %957 = vmatprep.subr.mxu0 0.0
    %958 = vmatpush1.msra.mxu0 0.0
    %959 = vmatprep.subr.mxu0 0.0
    %960 = vmatpush1.msra.mxu0 0.0
    %961 = vmatprep.subr.mxu0 0.0
    %962 = vmatpush1.msra.mxu0 0.0
    %963 = vmatprep.subr.mxu0 0.0
    %964 = vmatpush1.msra.mxu0 0.0
    %965 = vmatprep.subr.mxu0 0.0
    %966 = vmatpush1.msra.mxu0 0.0
    %967 = vmatprep.subr.mxu0 0.0
    %968 = vmatpush1.msra.mxu0 0.0
    %969 = vmatprep.subr.mxu0 0.0
    %970 = vmatpush1.msra.mxu0 0.0
    %971 = vmatprep.subr.mxu0 0.0
    %972 = vmatpush1.msra.mxu0 0.0
    %973 = vmatprep.subr.mxu0 0.0
    %974 = vmatpush1.msra.mxu0 0.0
    %975 = vmatprep.subr.mxu0 0.0
    %976 = vmatpush1.msra.mxu0 0.0
    %977 = vmatprep.subr.mxu0 0.0
    %978 = vmatpush1.msra.mxu0 0.0
    %979 = vmatprep.subr.mxu0 0.0
    %980 = vmatpush1.msra.mxu0 0.0
    %981 = vmatprep.subr.mxu0 0.0
    %982 = vmatpush1.msra.mxu0 0.0
    %983 = vmatprep.subr.mxu0 0.0
    %984 = vmatpush1.msra.mxu0 0.0
    %985 = vmatprep.subr.mxu0 0.0
    %986 = vmatpush1.msra.mxu0 0.0
    %987 = vmatprep.mubr.f32.mxu0 0.0
    %988 = vmatmul.mubr.f32.gmra.mrb[0].mxu0 %v921
    %v989 = vpop.f32.mrb[0].mxu0
    %v990 = vadd.f32 0.0, %v989
    %v991 = vpop.f32.mrb[0].mxu0
    %992 = vdwg.mxu0
    %v994 = vrot.slane %v990, 1
    %v996 = vadd.f32 %v126, %v994
    %v997 = vxor.u32 %v996, 2147483648
    %v998 = vmul.f32 %v997, 1.442695
    %v999 = vpow.pop %v998
    %v1000 = vadd.f32 %v999, 1.0
    %v1001 = vrcp.pop %v1000
    %v1002 = vmul.f32 1.0, %v1001
    %v1003 = vadd.f32 %v990, %v26
    %v1005 = vrot.slane %v1003, 1
    %1006 = vrot.lane.b32.xlu0 %v1005, 64
    %v1007 = vpop.permute.xlu0 %1006
    %v1009 = vmul.f32 %v1002, %v1007
    %1011 = vrot.lane.b32.xlu0 %v1009, 64
    %v1012 = vpop.permute.xlu0 %1011
    %v1014 = vadd.f32 %v119, %v1012
    %v1015 = vtanh.pop %v1014
    %v1016 = vsub.f32 1.0, %v1002
    %1018 = vrot.lane.b32.xlu0 %v1015, 96
    %v1019 = vpop.permute.xlu0 %1018
    %v1021 = vmul.f32 %v1016, %v1019
    %v1022 = vrot.slane %v911, 7
    %v1024 = vmul.f32 %v1002, %v1022
    %v1025 = vadd.f32 %v1021, %v1024
    %1027 = vrot.lane.b32.xlu0 %v1025, 96
    %v1028 = vpop.permute.xlu0 %1027
    %vm1030 = vcmask 261127
    %1031 = vst.msk [vmem:[#allocation2] sm:$0x80] %vm1030, %v1028
    %v1032 = vld [vmem:[#allocation2] sm:$0xff]
    %v1033 = vlaneseq
    %v1034 = vshrl.u32 %v1033, 7
    %v1035 = vsub.s32 0, %v1034
    %v1036 = vrot.slane %v31, %v1035
    %v1038 = vsel %vm127, %v1032, 0
    %1040 = vmatprep.subr.mxu0 0.0
    %1041 = vmatpush1.msra.mxu0 %v27
    %1042 = vmatprep.subr.mxu0 0.0
    %1043 = vmatpush1.msra.mxu0 %v28
    %1044 = vmatprep.subr.mxu0 0.0
    %1045 = vmatpush1.msra.mxu0 %v29
    %1046 = vmatprep.subr.mxu0 0.0
    %1047 = vmatpush1.msra.mxu0 %v30
    %1048 = vmatprep.subr.mxu0 0.0
    %1049 = vmatpush1.msra.mxu0 0.0
    %1050 = vmatprep.subr.mxu0 0.0
    %1051 = vmatpush1.msra.mxu0 0.0
    %1052 = vmatprep.subr.mxu0 0.0
    %1053 = vmatpush1.msra.mxu0 0.0
    %1054 = vmatprep.subr.mxu0 0.0
    %1055 = vmatpush1.msra.mxu0 0.0
    %1056 = vmatprep.subr.mxu0 0.0
    %1057 = vmatpush1.msra.mxu0 0.0
    %1058 = vmatprep.subr.mxu0 0.0
    %1059 = vmatpush1.msra.mxu0 0.0
    %1060 = vmatprep.subr.mxu0 0.0
    %1061 = vmatpush1.msra.mxu0 0.0
    %1062 = vmatprep.subr.mxu0 0.0
    %1063 = vmatpush1.msra.mxu0 0.0
    %1064 = vmatprep.subr.mxu0 0.0
    %1065 = vmatpush1.msra.mxu0 0.0
    %1066 = vmatprep.subr.mxu0 0.0
    %1067 = vmatpush1.msra.mxu0 0.0
    %1068 = vmatprep.subr.mxu0 0.0
    %1069 = vmatpush1.msra.mxu0 0.0
    %1070 = vmatprep.subr.mxu0 0.0
    %1071 = vmatpush1.msra.mxu0 0.0
    %1072 = vmatprep.subr.mxu0 0.0
    %1073 = vmatpush1.msra.mxu0 0.0
    %1074 = vmatprep.subr.mxu0 0.0
    %1075 = vmatpush1.msra.mxu0 0.0
    %1076 = vmatprep.subr.mxu0 0.0
    %1077 = vmatpush1.msra.mxu0 0.0
    %1078 = vmatprep.subr.mxu0 0.0
    %1079 = vmatpush1.msra.mxu0 0.0
    %1080 = vmatprep.subr.mxu0 0.0
    %1081 = vmatpush1.msra.mxu0 0.0
    %1082 = vmatprep.subr.mxu0 0.0
    %1083 = vmatpush1.msra.mxu0 0.0
    %1084 = vmatprep.subr.mxu0 0.0
    %1085 = vmatpush1.msra.mxu0 0.0
    %1086 = vmatprep.subr.mxu0 0.0
    %1087 = vmatpush1.msra.mxu0 0.0
    %1088 = vmatprep.subr.mxu0 0.0
    %1089 = vmatpush1.msra.mxu0 0.0
    %1090 = vmatprep.subr.mxu0 0.0
    %1091 = vmatpush1.msra.mxu0 0.0
    %1092 = vmatprep.subr.mxu0 0.0
    %1093 = vmatpush1.msra.mxu0 0.0
    %1094 = vmatprep.subr.mxu0 0.0
    %1095 = vmatpush1.msra.mxu0 0.0
    %1096 = vmatprep.subr.mxu0 0.0
    %1097 = vmatpush1.msra.mxu0 0.0
    %1098 = vmatprep.subr.mxu0 0.0
    %1099 = vmatpush1.msra.mxu0 0.0
    %1100 = vmatprep.subr.mxu0 0.0
    %1101 = vmatpush1.msra.mxu0 0.0
    %1102 = vmatprep.subr.mxu0 0.0
    %1103 = vmatpush1.msra.mxu0 0.0
    %1104 = vmatprep.mubr.f32.mxu0 0.0
    %1105 = vmatmul.mubr.f32.gmra.mrb[0].mxu0 %v1038
    %v1106 = vpop.f32.mrb[0].mxu0
    %v1107 = vadd.f32 %v1036, %v1106
    %v1108 = vpop.f32.mrb[0].mxu0
    %1109 = vdwg.mxu0
    %v1110 = vtanh.pop %v1107
    %vm1111 = vcmp.ne.f32.partialorder %v1110, %v1110
    %v1112 = vsel %vm1111, 0.0, %v1110
    %v1113 = vlaneseq
    %v1114 = vshrl.u32 %v1113, 7
    %v1115 = vsub.s32 0, %v1114
    %v1116 = vrot.slane %v32, %v1115
    %v1117 = vmul.f32 %v1112, %v1116
    %v1118 = vsel %vm127, %v1117, 0.0
    %1119 = vadd.xlane.f32.xlu0 %v1118
    %v1120 = vpop.xlane.xlu0 %1119
    %v1121 = vtanh.pop %v1120
    %vm1122 = vcmp.ne.f32.partialorder %v1121, %v1121
    %v1123 = vsel %vm1122, 0.0, %v1121
    %v1124 = vlaneseq
    %v1125 = vshrl.u32 %v1124, 7
    %v1126 = vlaneseq
    %v1127 = vand.u32 %v1126, 127
    %vm1128 = vcmp.eq.s32.totalorder %v1125, %v1127
    %v1129 = vsel %vm1128, %v1123, 0.0
    %vm1130 = vcmask 64512
    %v1131 = vsel %vm1130, %v1129, 0.0
    %v1132 = vrot.slane %v1131, 4
    %v1133 = vadd.f32 %v1131, %v1132
    %v1134 = vrot.slane %v1133, 2
    %v1135 = vadd.f32 %v1133, %v1134
    %v1136 = vrot.slane %v1135, 1
    %v1137 = vadd.f32 %v1135, %v1136
    %v1138 = vsel %vm1130, %v1137, -inf
    %1139 = vmax.xlane.f32.xlu0 %v1138
    %v1140 = vpop.xlane.xlu0 %1139
    %v1141 = vsub.f32 %v1137, %v1140
    %v1142 = vmul.f32 %v1141, 1.442695
    %v1143 = vpow.pop %v1142
    %v1144 = vsel %vm1130, %v1143, 0.0
    %1145 = vadd.xlane.f32.xlu0 %v1144
    %v1146 = vpop.xlane.xlu0 %1145
    %v1147 = vrcp.pop %v1146
    %v1148 = vmul.f32 %v1143, %v1147
    %vm1149 = vcmask 57344
    %1150 = vst.msk [vmem:[%s5] sm:$0x1] %vm1149, %v1148
    %v1152 = vsel %vm1130, %v1148, 0
    %1154 = vmatprep.subr.mxu0 0.0
    %1155 = vmatpush1.msra.mxu0 %v1032
    %1156 = vmatprep.subr.mxu0 0.0
    %1157 = vmatpush1.msra.mxu0 0.0
    %1158 = vmatprep.subr.mxu0 0.0
    %1159 = vmatpush1.msra.mxu0 0.0
    %1160 = vmatprep.subr.mxu0 0.0
    %1161 = vmatpush1.msra.mxu0 0.0
    %1162 = vmatprep.subr.mxu0 0.0
    %1163 = vmatpush1.msra.mxu0 0.0
    %1164 = vmatprep.subr.mxu0 0.0
    %1165 = vmatpush1.msra.mxu0 0.0
    %1166 = vmatprep.subr.mxu0 0.0
    %1167 = vmatpush1.msra.mxu0 0.0
    %1168 = vmatprep.subr.mxu0 0.0
    %1169 = vmatpush1.msra.mxu0 0.0
    %1170 = vmatprep.subr.mxu0 0.0
    %1171 = vmatpush1.msra.mxu0 0.0
    %1172 = vmatprep.subr.mxu0 0.0
    %1173 = vmatpush1.msra.mxu0 0.0
    %1174 = vmatprep.subr.mxu0 0.0
    %1175 = vmatpush1.msra.mxu0 0.0
    %1176 = vmatprep.subr.mxu0 0.0
    %1177 = vmatpush1.msra.mxu0 0.0
    %1178 = vmatprep.subr.mxu0 0.0
    %1179 = vmatpush1.msra.mxu0 0.0
    %1180 = vmatprep.subr.mxu0 0.0
    %1181 = vmatpush1.msra.mxu0 0.0
    %1182 = vmatprep.subr.mxu0 0.0
    %1183 = vmatpush1.msra.mxu0 0.0
    %1184 = vmatprep.subr.mxu0 0.0
    %1185 = vmatpush1.msra.mxu0 0.0
    %1186 = vmatprep.subr.mxu0 0.0
    %1187 = vmatpush1.msra.mxu0 0.0
    %1188 = vmatprep.subr.mxu0 0.0
    %1189 = vmatpush1.msra.mxu0 0.0
    %1190 = vmatprep.subr.mxu0 0.0
    %1191 = vmatpush1.msra.mxu0 0.0
    %1192 = vmatprep.subr.mxu0 0.0
    %1193 = vmatpush1.msra.mxu0 0.0
    %1194 = vmatprep.subr.mxu0 0.0
    %1195 = vmatpush1.msra.mxu0 0.0
    %1196 = vmatprep.subr.mxu0 0.0
    %1197 = vmatpush1.msra.mxu0 0.0
    %1198 = vmatprep.subr.mxu0 0.0
    %1199 = vmatpush1.msra.mxu0 0.0
    %1200 = vmatprep.subr.mxu0 0.0
    %1201 = vmatpush1.msra.mxu0 0.0
    %1202 = vmatprep.subr.mxu0 0.0
    %1203 = vmatpush1.msra.mxu0 0.0
    %1204 = vmatprep.subr.mxu0 0.0
    %1205 = vmatpush1.msra.mxu0 0.0
    %1206 = vmatprep.subr.mxu0 0.0
    %1207 = vmatpush1.msra.mxu0 0.0
    %1208 = vmatprep.subr.mxu0 0.0
    %1209 = vmatpush1.msra.mxu0 0.0
    %1210 = vmatprep.subr.mxu0 0.0
    %1211 = vmatpush1.msra.mxu0 0.0
    %1212 = vmatprep.subr.mxu0 0.0
    %1213 = vmatpush1.msra.mxu0 0.0
    %1214 = vmatprep.subr.mxu0 0.0
    %1215 = vmatpush1.msra.mxu0 0.0
    %1216 = vmatprep.subr.mxu0 0.0
    %1217 = vmatpush1.msra.mxu0 0.0
    %1218 = vmatprep.mubr.f32.mxu0 0.0
    %1219 = vmatmul.mubr.f32.gmra.mrb[0].mxu0 %v1152
    %v1220 = vpop.f32.mrb[0].mxu0
    %v1221 = vadd.f32 0.0, %v1220
    %v1222 = vpop.f32.mrb[0].mxu0
    %1223 = vdwg.mxu0
    %v1225 = vsel %vm127, %v1221, 0
    %1227 = vmatprep.subr.mxu0 0.0
    %1228 = vmatpush1.msra.mxu0 %v34
    %1229 = vmatprep.subr.mxu0 0.0
    %1230 = vmatpush1.msra.mxu0 %v35
    %1231 = vmatprep.subr.mxu0 0.0
    %1232 = vmatpush1.msra.mxu0 %v36
    %1233 = vmatprep.subr.mxu0 0.0
    %1234 = vmatpush1.msra.mxu0 %v37
    %1235 = vmatprep.subr.mxu0 0.0
    %1236 = vmatpush1.msra.mxu0 0.0
    %1237 = vmatprep.subr.mxu0 0.0
    %1238 = vmatpush1.msra.mxu0 0.0
    %1239 = vmatprep.subr.mxu0 0.0
    %1240 = vmatpush1.msra.mxu0 0.0
    %1241 = vmatprep.subr.mxu0 0.0
    %1242 = vmatpush1.msra.mxu0 0.0
    %1243 = vmatprep.subr.mxu0 0.0
    %1244 = vmatpush1.msra.mxu0 0.0
    %1245 = vmatprep.subr.mxu0 0.0
    %1246 = vmatpush1.msra.mxu0 0.0
    %1247 = vmatprep.subr.mxu0 0.0
    %1248 = vmatpush1.msra.mxu0 0.0
    %1249 = vmatprep.subr.mxu0 0.0
    %1250 = vmatpush1.msra.mxu0 0.0
    %1251 = vmatprep.subr.mxu0 0.0
    %1252 = vmatpush1.msra.mxu0 0.0
    %1253 = vmatprep.subr.mxu0 0.0
    %1254 = vmatpush1.msra.mxu0 0.0
    %1255 = vmatprep.subr.mxu0 0.0
    %1256 = vmatpush1.msra.mxu0 0.0
    %1257 = vmatprep.subr.mxu0 0.0
    %1258 = vmatpush1.msra.mxu0 0.0
    %1259 = vmatprep.subr.mxu0 0.0
    %1260 = vmatpush1.msra.mxu0 0.0
    %1261 = vmatprep.subr.mxu0 0.0
    %1262 = vmatpush1.msra.mxu0 0.0
    %1263 = vmatprep.subr.mxu0 0.0
    %1264 = vmatpush1.msra.mxu0 0.0
    %1265 = vmatprep.subr.mxu0 0.0
    %1266 = vmatpush1.msra.mxu0 0.0
    %1267 = vmatprep.subr.mxu0 0.0
    %1268 = vmatpush1.msra.mxu0 0.0
    %1269 = vmatprep.subr.mxu0 0.0
    %1270 = vmatpush1.msra.mxu0 0.0
    %1271 = vmatprep.subr.mxu0 0.0
    %1272 = vmatpush1.msra.mxu0 0.0
    %1273 = vmatprep.subr.mxu0 0.0
    %1274 = vmatpush1.msra.mxu0 0.0
    %1275 = vmatprep.subr.mxu0 0.0
    %1276 = vmatpush1.msra.mxu0 0.0
    %1277 = vmatprep.subr.mxu0 0.0
    %1278 = vmatpush1.msra.mxu0 0.0
    %1279 = vmatprep.subr.mxu0 0.0
    %1280 = vmatpush1.msra.mxu0 0.0
    %1281 = vmatprep.subr.mxu0 0.0
    %1282 = vmatpush1.msra.mxu0 0.0
    %1283 = vmatprep.subr.mxu0 0.0
    %1284 = vmatpush1.msra.mxu0 0.0
    %1285 = vmatprep.subr.mxu0 0.0
    %1286 = vmatpush1.msra.mxu0 0.0
    %1287 = vmatprep.subr.mxu0 0.0
    %1288 = vmatpush1.msra.mxu0 0.0
    %1289 = vmatprep.subr.mxu0 0.0
    %1290 = vmatpush1.msra.mxu0 0.0
    %1291 = vmatprep.mubr.f32.mxu0 0.0
    %1292 = vmatmul.mubr.f32.gmra.mrb[0].mxu0 %v1225
    %v1293 = vpop.f32.mrb[0].mxu0
    %v1294 = vadd.f32 %v38, %v1293
    %v1295 = vpop.f32.mrb[0].mxu0
    %1296 = vdwg.mxu0
    %vm1297 = vcmask 24576
    %1298 = vst.msk [vmem:[#allocation3] sm:$0x1] %vm1297, %v1294
    // Predicated region
    $region18: #{rnn_model_forward.1} parent=1 // pred_check
      _
    $region19: #{rnn_model_forward.1} parent=1 // pred_check_branch
      %1300 = sbr.rel (0) target = $region21
    $region20: #{rnn_model_forward.1} parent=1 // pred_region
      %s1302 = ssub.s32 16, 16
      %1303 = vsyncadd [#allocation4], %s1302
      %s1305 = sshll.u32 [#allocation3], 4
      %s1306 = int_to_ptr.vmem [resolvable:$true] %s1305
      %1308 = dma.vmem_to_hbm [thread:$0]  %s1306, 16, %s4, [#allocation4]
    $region21: #{rnn_model_forward.1} parent=1 // pred_fallthru
      _
    // Predicated region
    $region22: #{rnn_model_forward.1} parent=1 // pred_check
      _
    $region23: #{rnn_model_forward.1} parent=1 // pred_check_branch
      %1310 = sbr.rel (0) target = $region25
    $region24: #{rnn_model_forward.1} parent=1 // pred_region
      _
    $region25: #{rnn_model_forward.1} parent=1 // pred_fallthru
      _
    // Predicated region
    $region26: #{rnn_model_forward.1} parent=1 // pred_check
      _
    $region27: #{rnn_model_forward.1} parent=1 // pred_check_branch
      %1312 = sbr.rel (0) target = $region29
    $region28: #{rnn_model_forward.1} parent=1 // pred_region
      %1313 = dma.done [#allocation4], 16
    $region29: #{rnn_model_forward.1} parent=1 // pred_fallthru
      _
    // Predicated region
    $region30: #{rnn_model_forward.1} parent=1 // pred_check
      _
    $region31: #{rnn_model_forward.1} parent=1 // pred_check_branch
      %1315 = sbr.rel (0) target = $region33
    $region32: #{rnn_model_forward.1} parent=1 // pred_region
      _
    $region33: #{rnn_model_forward.1} parent=1 // pred_fallthru
      _
    %1316 = vsyncpa [#allocation4], 1

</llo_original>
